<compile_context>
chip_gen: v6e
topology: v6e:2x2x1
jax: 0.10.0
libtpu: 0.0.40
codegen_flags: <defaults>
</compile_context>

<pallas_src>
import functools

import jax
import jax.numpy as jnp
from jax.experimental import pallas as pl
from jax.experimental.pallas import tpu as pltpu


def _round_up(x, m):
    return ((x + m - 1) // m) * m


def _ffn_kernel(x_ref, w1_ref, b1_ref, w2_ref, b2_ref, out_ref, *,
                K1, lead, time_chunk):
    """One batch row per grid step; whole padded time axis resident in VMEM.

    x_ref   : (1, N_t, d_in_p)        f32  (lead zeros | x | trailing zeros)
    w1_ref  : (K1 * d_in_p, d_hid_p)  bf16 (tap-major im2col weight of conv1)
    b1_ref  : (1, d_hid_p)            f32
    w2_ref  : (d_hid_p, d_in_p)       bf16 (pointwise conv2)
    b2_ref  : (1, d_in_p)             f32
    out_ref : (1, T_p, d_in_p)        f32
    """
    T_out = out_ref.shape[1]
    pad = (K1 - 1) // 2
    cdt = w1_ref.dtype                         # MXU operand dtype (bf16)

    w1m = w1_ref[...]
    w2m = w2_ref[...]
    b1v = b1_ref[...]
    b2v = b2_ref[...]

    # Static time chunks keep the im2col / hidden intermediates small for long
    # sequences; x is only re-sliced from the resident VMEM block here.
    for c0 in range(0, T_out, time_chunk):
        tc = min(time_chunk, T_out - c0)

        # im2col: K1 time-shifted full-lane-width slices of the f32 block, cast per
        # slice (8-row sublane granularity), lane-concatenated into one MXU LHS.
        s0 = lead - pad + c0
        pieces = [x_ref[0, s0 + k:s0 + k + tc, :].astype(cdt) for k in range(K1)]
        cols = jnp.concatenate(pieces, axis=-1)            # (tc, K1*d_in_p)

        h = jnp.dot(cols, w1m, preferred_element_type=jnp.float32) + b1v

        # Mish(h) = h * tanh(softplus(h)) = h * p(p+2) / (p(p+2) + 2), p = exp(h).
        # Cap h to avoid exp overflow; for h >= 20 the ratio is 1.0 in f32.
        p = jnp.exp(jnp.minimum(h, 20.0))
        t2 = p * (p + 2.0)
        h = h * (t2 * pl.reciprocal(t2 + 2.0, approx=True))

        # Pointwise conv2 + bias + residual (residual slice start lead+c0 is 8-aligned).
        y = jnp.dot(h.astype(cdt), w2m, preferred_element_type=jnp.float32)
        y = y + b2v + x_ref[0, lead + c0:lead + c0 + tc, :]
        out_ref[0, c0:c0 + tc, :] = y.astype(out_ref.dtype)


def positionwise_ffn(x, w1, b1, w2, b2, *, time_chunk=512,
                     compute_dtype=jnp.bfloat16, single_buffer_weights=True):
    """x: (B, T, d_in) float32.
    w1: torch Conv1d weight (d_hid, d_in, K1); b1: (d_hid,)
    w2: torch Conv1d weight (d_in, d_hid, 1);  b2: (d_in,)
    """
    B, T, d_in = x.shape
    d_hid, _, K1 = w1.shape
    pad = (K1 - 1) // 2

    LANE, SUB = 128, 8
    d_in_p = _round_up(d_in, LANE)
    d_hid_p = _round_up(d_hid, LANE)

    # Whole (padded) time axis per batch row.  The leading pad is a multiple of 8 so
    # the in-kernel residual slice is sublane aligned, and this single padded copy is
    # the only HBM materialisation of x (the old per-tile halo gather is gone).
    T_p = _round_up(T, SUB)
    lead = max(SUB, _round_up(pad, SUB))
    N_t = T_p + 2 * lead
    xc = jnp.pad(x, ((0, 0), (lead, N_t - T - lead), (0, d_in_p - d_in)))

    # In-kernel time chunk (multiple of 8, <= T_p).
    time_chunk = max(SUB, _round_up(min(time_chunk, T_p), SUB))

    # Weight re-layout: tap-major im2col matrix for conv1, plain matrix for conv2.
    w1_t = jnp.transpose(w1, (2, 1, 0))                              # (K1, d_in, d_hid)
    w1_p = jnp.pad(w1_t, ((0, 0), (0, d_in_p - d_in), (0, d_hid_p - d_hid)))
    w1_mat = w1_p.reshape(K1 * d_in_p, d_hid_p).astype(compute_dtype)
    b1_p = jnp.pad(b1, (0, d_hid_p - d_hid)).reshape(1, d_hid_p).astype(jnp.float32)
    w2_t = jnp.transpose(w2[:, :, 0], (1, 0))                        # (d_hid, d_in)
    w2_p = jnp.pad(w2_t, ((0, d_hid_p - d_hid), (0, d_in_p - d_in))).astype(compute_dtype)
    b2_p = jnp.pad(b2, (0, d_in_p - d_in)).reshape(1, d_in_p).astype(jnp.float32)

    def _weight_spec(shape):
        # Grid-invariant constants: single-buffered to free VMEM headroom (review).
        if single_buffer_weights:
            return pl.BlockSpec(shape, lambda b: (0, 0), pipeline_mode=pl.Buffered(1))
        return pl.BlockSpec(shape, lambda b: (0, 0))

    out = pl.pallas_call(
        functools.partial(_ffn_kernel, K1=K1, lead=lead, time_chunk=time_chunk),
        out_shape=jax.ShapeDtypeStruct((B, T_p, d_in_p), jnp.float32),
        grid=(B,),
        in_specs=[
            pl.BlockSpec((1, N_t, d_in_p), lambda b: (b, 0, 0)),
            _weight_spec((K1 * d_in_p, d_hid_p)),
            _weight_spec((1, d_hid_p)),
            _weight_spec((d_hid_p, d_in_p)),
            _weight_spec((1, d_in_p)),
        ],
        out_specs=pl.BlockSpec((1, T_p, d_in_p), lambda b: (b, 0, 0)),
        # Batch is the flat parallel axis: even split across v7x's 2 TensorCores;
        # single-TC chips (v5e/v6e) just run it as the sequential grid loop.
        compiler_params=pltpu.CompilerParams(
            dimension_semantics=("parallel",)),
    )(xc, w1_mat, b1_p, w2_p, b2_p)

    # Lane-dense padded 3-D output: only the final logical slice remains.
    return out[:, :T, :d_in].astype(x.dtype)


def _reference(x, w1, b1, w2, b2, compute_dtype=jnp.bfloat16):
    """Pure-JAX reference (eval mode), mirroring the bf16 MXU-operand casts."""
    B, T, d_in = x.shape
    d_hid, _, K1 = w1.shape
    pad = (K1 - 1) // 2
    x_pad = jnp.pad(x, ((0, 0), (pad, pad), (0, 0))).astype(compute_dtype)
    w1_t = jnp.transpose(w1, (2, 1, 0)).astype(compute_dtype)        # (K1, d_in, d_hid)
    h = jnp.zeros((B, T, d_hid), jnp.float32)
    for t in range(K1):
        h = h + jnp.einsum("bti,ih->bth", x_pad[:, t:t + T, :], w1_t[t],
                           preferred_element_type=jnp.float32)
    h = h + b1[None, None, :]
    h = h * jnp.tanh(jnp.logaddexp(h, 0.0))                          # Mish (exact form)
    w2_t = jnp.transpose(w2[:, :, 0], (1, 0)).astype(compute_dtype)
    y = jnp.einsum("bth,hi->bti", h.astype(compute_dtype), w2_t,
                   preferred_element_type=jnp.float32)
    return y + b2[None, None, :] + x


def _run_ffn(x, w1, b1, w2, b2, **kw):
    try:
        return jax.block_until_ready(positionwise_ffn(x, w1, b1, w2, b2, **kw))
    except Exception:
        # Fallback for Pallas builds where BlockSpec.pipeline_mode isn't plumbed
        # through pallas_call: weights revert to default double-buffering
        # (identical results, slightly more VMEM).
        return jax.block_until_ready(
            positionwise_ffn(x, w1, b1, w2, b2, single_buffer_weights=False, **kw))


if __name__ == "__main__":
    key = jax.random.PRNGKey(0)
    k_x, k_w1, k_b1, k_w2, k_b2, k_x2 = jax.random.split(key, 6)

    # Small shapes consistent with the module: (B, T, d_in), Conv1d kernels (9, 1).
    B, T, d_in, d_hid = 2, 16, 32, 64
    K1, K2 = 9, 1

    x = jax.random.normal(k_x, (B, T, d_in), jnp.float32)
    # Deterministic synthetic parameters (torch Conv1d weight layout: out, in, k).
    w1 = jax.random.normal(k_w1, (d_hid, d_in, K1), jnp.float32) * 0.05
    b1 = jax.random.normal(k_b1, (d_hid,), jnp.float32) * 0.05
    w2 = jax.random.normal(k_w2, (d_in, d_hid, K2), jnp.float32) * 0.05
    b2 = jax.random.normal(k_b2, (d_in,), jnp.float32) * 0.05

    out = _run_ffn(x, w1, b1, w2, b2)
    ref = jax.block_until_ready(_reference(x, w1, b1, w2, b2))
    assert out.shape == (B, T, d_in)
    assert jnp.allclose(out, ref, atol=2e-2, rtol=2e-2), "mismatch vs JAX reference"

    # Second config exercising tail padding + multi-chunk in-kernel time loop.
    T2 = 40
    x2 = jax.random.normal(k_x2, (B, T2, d_in), jnp.float32)
    out2 = _run_ffn(x2, w1, b1, w2, b2, time_chunk=16)
    ref2 = jax.block_until_ready(_reference(x2, w1, b1, w2, b2))
    assert out2.shape == (B, T2, d_in)
    assert jnp.allclose(out2, ref2, atol=2e-2, rtol=2e-2), "mismatch vs JAX reference (chunked)"

    print("KERNEL_OK")
</pallas_src>

<mosaic_0001>
module attributes {stable_mosaic.version = 11 : i64} {
  func.func @_ffn_kernel(%arg0: i32, %arg1: memref<1x32x128xf32, #tpu.memory_space<vmem>>, %arg2: memref<1152x128xbf16, #tpu.memory_space<vmem>>, %arg3: memref<1x128xf32, #tpu.memory_space<vmem>>, %arg4: memref<128x128xbf16, #tpu.memory_space<vmem>>, %arg5: memref<1x128xf32, #tpu.memory_space<vmem>>, %arg6: memref<1x16x128xf32, #tpu.memory_space<vmem>>) attributes {dimension_semantics = [#tpu.dimension_semantics<parallel>], iteration_bounds = array<i64: 2>, scalar_prefetch = 0 : i64, scratch_operands = 0 : i64, tpu.core_type = #tpu.core_type<tc>, window_params = [{transform_indices = @transform_0, window_bounds = array<i64: 1, 32, 128>}, {pipeline_mode = #tpu.pipeline_mode<synchronous>, transform_indices = @transform_1, window_bounds = array<i64: 1152, 128>}, {pipeline_mode = #tpu.pipeline_mode<synchronous>, transform_indices = @transform_2, window_bounds = array<i64: 1, 128>}, {pipeline_mode = #tpu.pipeline_mode<synchronous>, transform_indices = @transform_3, window_bounds = array<i64: 128, 128>}, {pipeline_mode = #tpu.pipeline_mode<synchronous>, transform_indices = @transform_4, window_bounds = array<i64: 1, 128>}, {transform_indices = @transform_5, window_bounds = array<i64: 1, 16, 128>}]} {
    %c0 = arith.constant 0 : index
    %c0_0 = arith.constant 0 : index
    %0 = vector.load %arg2[%c0, %c0_0] : memref<1152x128xbf16, #tpu.memory_space<vmem>>, vector<1152x128xbf16>
    %c0_1 = arith.constant 0 : index
    %c0_2 = arith.constant 0 : index
    %1 = vector.load %arg4[%c0_1, %c0_2] : memref<128x128xbf16, #tpu.memory_space<vmem>>, vector<128x128xbf16>
    %c0_3 = arith.constant 0 : index
    %c0_4 = arith.constant 0 : index
    %2 = vector.load %arg3[%c0_3, %c0_4] : memref<1x128xf32, #tpu.memory_space<vmem>>, vector<1x128xf32>
    %c0_5 = arith.constant 0 : index
    %c0_6 = arith.constant 0 : index
    %3 = vector.load %arg5[%c0_5, %c0_6] : memref<1x128xf32, #tpu.memory_space<vmem>>, vector<1x128xf32>
    %c0_7 = arith.constant 0 : index
    %c4 = arith.constant 4 : index
    %c0_8 = arith.constant 0 : index
    %4 = vector.load %arg1[%c0_7, %c4, %c0_8] : memref<1x32x128xf32, #tpu.memory_space<vmem>>, vector<1x16x128xf32>
    %5 = vector.shape_cast %4 : vector<1x16x128xf32> to vector<16x128xf32>
    %6 = arith.truncf %5 : vector<16x128xf32> to vector<16x128xbf16>
    %c0_9 = arith.constant 0 : index
    %c5 = arith.constant 5 : index
    %c0_10 = arith.constant 0 : index
    %7 = vector.load %arg1[%c0_9, %c5, %c0_10] : memref<1x32x128xf32, #tpu.memory_space<vmem>>, vector<1x16x128xf32>
    %8 = vector.shape_cast %7 : vector<1x16x128xf32> to vector<16x128xf32>
    %9 = arith.truncf %8 : vector<16x128xf32> to vector<16x128xbf16>
    %c0_11 = arith.constant 0 : index
    %c6 = arith.constant 6 : index
    %c0_12 = arith.constant 0 : index
    %10 = vector.load %arg1[%c0_11, %c6, %c0_12] : memref<1x32x128xf32, #tpu.memory_space<vmem>>, vector<1x16x128xf32>
    %11 = vector.shape_cast %10 : vector<1x16x128xf32> to vector<16x128xf32>
    %12 = arith.truncf %11 : vector<16x128xf32> to vector<16x128xbf16>
    %c0_13 = arith.constant 0 : index
    %c7 = arith.constant 7 : index
    %c0_14 = arith.constant 0 : index
    %13 = vector.load %arg1[%c0_13, %c7, %c0_14] : memref<1x32x128xf32, #tpu.memory_space<vmem>>, vector<1x16x128xf32>
    %14 = vector.shape_cast %13 : vector<1x16x128xf32> to vector<16x128xf32>
    %15 = arith.truncf %14 : vector<16x128xf32> to vector<16x128xbf16>
    %c0_15 = arith.constant 0 : index
    %c8 = arith.constant 8 : index
    %c0_16 = arith.constant 0 : index
    %16 = vector.load %arg1[%c0_15, %c8, %c0_16] : memref<1x32x128xf32, #tpu.memory_space<vmem>>, vector<1x16x128xf32>
    %17 = vector.shape_cast %16 : vector<1x16x128xf32> to vector<16x128xf32>
    %18 = arith.truncf %17 : vector<16x128xf32> to vector<16x128xbf16>
    %c0_17 = arith.constant 0 : index
    %c9 = arith.constant 9 : index
    %c0_18 = arith.constant 0 : index
    %19 = vector.load %arg1[%c0_17, %c9, %c0_18] : memref<1x32x128xf32, #tpu.memory_space<vmem>>, vector<1x16x128xf32>
    %20 = vector.shape_cast %19 : vector<1x16x128xf32> to vector<16x128xf32>
    %21 = arith.truncf %20 : vector<16x128xf32> to vector<16x128xbf16>
    %c0_19 = arith.constant 0 : index
    %c10 = arith.constant 10 : index
    %c0_20 = arith.constant 0 : index
    %22 = vector.load %arg1[%c0_19, %c10, %c0_20] : memref<1x32x128xf32, #tpu.memory_space<vmem>>, vector<1x16x128xf32>
    %23 = vector.shape_cast %22 : vector<1x16x128xf32> to vector<16x128xf32>
    %24 = arith.truncf %23 : vector<16x128xf32> to vector<16x128xbf16>
    %c0_21 = arith.constant 0 : index
    %c11 = arith.constant 11 : index
    %c0_22 = arith.constant 0 : index
    %25 = vector.load %arg1[%c0_21, %c11, %c0_22] : memref<1x32x128xf32, #tpu.memory_space<vmem>>, vector<1x16x128xf32>
    %26 = vector.shape_cast %25 : vector<1x16x128xf32> to vector<16x128xf32>
    %27 = arith.truncf %26 : vector<16x128xf32> to vector<16x128xbf16>
    %c0_23 = arith.constant 0 : index
    %c12 = arith.constant 12 : index
    %c0_24 = arith.constant 0 : index
    %28 = vector.load %arg1[%c0_23, %c12, %c0_24] : memref<1x32x128xf32, #tpu.memory_space<vmem>>, vector<1x16x128xf32>
    %29 = vector.shape_cast %28 : vector<1x16x128xf32> to vector<16x128xf32>
    %30 = arith.truncf %29 : vector<16x128xf32> to vector<16x128xbf16>
    %31 = tpu.concatenate %6, %9, %12, %15, %18, %21, %24, %27, %30 in 1 : vector<16x128xbf16>, vector<16x128xbf16>, vector<16x128xbf16>, vector<16x128xbf16>, vector<16x128xbf16>, vector<16x128xbf16>, vector<16x128xbf16>, vector<16x128xbf16>, vector<16x128xbf16> -> vector<16x1152xbf16>
    %cst = arith.constant dense<0.000000e+00> : vector<16x128xf32>
    %32 = tpu.matmul %31, %0, %cst {dimension_numbers = #tpu.dot_dimension_numbers<[1], [0], [0], [1], [0, 0, 1, 1], [], []>} : vector<16x1152xbf16>, vector<1152x128xbf16>, vector<16x128xf32> -> vector<16x128xf32>
    %33 = vector.broadcast %2 : vector<1x128xf32> to vector<16x128xf32>
    %34 = arith.addf %32, %33 : vector<16x128xf32>
    %cst_25 = arith.constant 2.000000e+01 : f32
    %35 = vector.broadcast %cst_25 : f32 to vector<16x128xf32>
    %36 = arith.minimumf %34, %35 : vector<16x128xf32>
    %37 = math.exp %36 : vector<16x128xf32>
    %cst_26 = arith.constant 2.000000e+00 : f32
    %38 = vector.broadcast %cst_26 : f32 to vector<16x128xf32>
    %39 = arith.addf %37, %38 : vector<16x128xf32>
    %40 = arith.mulf %37, %39 : vector<16x128xf32>
    %cst_27 = arith.constant 2.000000e+00 : f32
    %41 = vector.broadcast %cst_27 : f32 to vector<16x128xf32>
    %42 = arith.addf %40, %41 : vector<16x128xf32>
    %43 = tpu.reciprocal %42 {approx = true} : vector<16x128xf32> -> vector<16x128xf32>
    %44 = arith.mulf %40, %43 : vector<16x128xf32>
    %45 = arith.mulf %34, %44 : vector<16x128xf32>
    %46 = arith.truncf %45 : vector<16x128xf32> to vector<16x128xbf16>
    %cst_28 = arith.constant dense<0.000000e+00> : vector<16x128xf32>
    %47 = tpu.matmul %46, %1, %cst_28 {dimension_numbers = #tpu.dot_dimension_numbers<[1], [0], [0], [1], [0, 0, 1, 1], [], []>} : vector<16x128xbf16>, vector<128x128xbf16>, vector<16x128xf32> -> vector<16x128xf32>
    %48 = vector.broadcast %3 : vector<1x128xf32> to vector<16x128xf32>
    %49 = arith.addf %47, %48 : vector<16x128xf32>
    %c0_29 = arith.constant 0 : index
    %c8_30 = arith.constant 8 : index
    %c0_31 = arith.constant 0 : index
    %50 = vector.load %arg1[%c0_29, %c8_30, %c0_31] : memref<1x32x128xf32, #tpu.memory_space<vmem>>, vector<1x16x128xf32>
    %51 = vector.shape_cast %50 : vector<1x16x128xf32> to vector<16x128xf32>
    %52 = arith.addf %49, %51 : vector<16x128xf32>
    %c0_32 = arith.constant 0 : index
    %c0_33 = arith.constant 0 : index
    %c0_34 = arith.constant 0 : index
    %53 = vector.load %arg6[%c0_32, %c0_33, %c0_34] : memref<1x16x128xf32, #tpu.memory_space<vmem>>, vector<1x16x128xf32>
    %54 = vector.shape_cast %53 : vector<1x16x128xf32> to vector<16x128xf32>
    %55 = vector.shape_cast %52 : vector<16x128xf32> to vector<1x16x128xf32>
    tpu.vector_store %arg6[%c0_32, %c0_33, %c0_34], %55 {strides = array<i32>} : memref<1x16x128xf32, #tpu.memory_space<vmem>>, vector<1x16x128xf32>,
    return
  }
  func.func @transform_0(%arg0: i32) -> (i32, i32, i32) {
    %c0_i32 = arith.constant 0 : i32
    %c0_i32_0 = arith.constant 0 : i32
    %c0_i32_1 = arith.constant 0 : i32
    return %arg0, %c0_i32, %c0_i32_0 : i32, i32, i32
  }
  func.func @transform_1(%arg0: i32) -> (i32, i32) {
    %c0_i32 = arith.constant 0 : i32
    %c0_i32_0 = arith.constant 0 : i32
    %c0_i32_1 = arith.constant 0 : i32
    return %c0_i32, %c0_i32_0 : i32, i32
  }
  func.func @transform_2(%arg0: i32) -> (i32, i32) {
    %c0_i32 = arith.constant 0 : i32
    %c0_i32_0 = arith.constant 0 : i32
    %c0_i32_1 = arith.constant 0 : i32
    return %c0_i32, %c0_i32_0 : i32, i32
  }
  func.func @transform_3(%arg0: i32) -> (i32, i32) {
    %c0_i32 = arith.constant 0 : i32
    %c0_i32_0 = arith.constant 0 : i32
    %c0_i32_1 = arith.constant 0 : i32
    return %c0_i32, %c0_i32_0 : i32, i32
  }
  func.func @transform_4(%arg0: i32) -> (i32, i32) {
    %c0_i32 = arith.constant 0 : i32
    %c0_i32_0 = arith.constant 0 : i32
    %c0_i32_1 = arith.constant 0 : i32
    return %c0_i32, %c0_i32_0 : i32, i32
  }
  func.func @transform_5(%arg0: i32) -> (i32, i32, i32) {
    %c0_i32 = arith.constant 0 : i32
    %c0_i32_0 = arith.constant 0 : i32
    %c0_i32_1 = arith.constant 0 : i32
    return %arg0, %c0_i32, %c0_i32_0 : i32, i32, i32
  }
}

module attributes {stable_mosaic.version = 11 : i64} {
  func.func @_ffn_kernel(%arg0: i32, %arg1: memref<1x32x128xf32, #tpu.memory_space<vmem>>, %arg2: memref<1152x128xbf16, #tpu.memory_space<vmem>>, %arg3: memref<1x128xf32, #tpu.memory_space<vmem>>, %arg4: memref<128x128xbf16, #tpu.memory_space<vmem>>, %arg5: memref<1x128xf32, #tpu.memory_space<vmem>>, %arg6: memref<1x16x128xf32, #tpu.memory_space<vmem>>) attributes {dimension_semantics = [#tpu.dimension_semantics<parallel>], iteration_bounds = array<i64: 2>, scalar_prefetch = 0 : i64, scratch_operands = 0 : i64, tpu.core_type = #tpu.core_type<tc>, window_params = [{transform_indices = @transform_0, window_bounds = array<i64: 1, 32, 128>}, {pipeline_mode = #tpu.pipeline_mode<synchronous>, transform_indices = @transform_1, window_bounds = array<i64: 1152, 128>}, {pipeline_mode = #tpu.pipeline_mode<synchronous>, transform_indices = @transform_2, window_bounds = array<i64: 1, 128>}, {pipeline_mode = #tpu.pipeline_mode<synchronous>, transform_indices = @transform_3, window_bounds = array<i64: 128, 128>}, {pipeline_mode = #tpu.pipeline_mode<synchronous>, transform_indices = @transform_4, window_bounds = array<i64: 1, 128>}, {transform_indices = @transform_5, window_bounds = array<i64: 1, 16, 128>}]} {
    %c0 = arith.constant 0 : index
    %c0_0 = arith.constant 0 : index
    %0 = vector.load %arg2[%c0, %c0_0] : memref<1152x128xbf16, #tpu.memory_space<vmem>>, vector<1152x128xbf16>
    %c0_1 = arith.constant 0 : index
    %c0_2 = arith.constant 0 : index
    %1 = vector.load %arg4[%c0_1, %c0_2] : memref<128x128xbf16, #tpu.memory_space<vmem>>, vector<128x128xbf16>
    %c0_3 = arith.constant 0 : index
    %c0_4 = arith.constant 0 : index
    %2 = vector.load %arg3[%c0_3, %c0_4] : memref<1x128xf32, #tpu.memory_space<vmem>>, vector<1x128xf32>
    %c0_5 = arith.constant 0 : index
    %c0_6 = arith.constant 0 : index
    %3 = vector.load %arg5[%c0_5, %c0_6] : memref<1x128xf32, #tpu.memory_space<vmem>>, vector<1x128xf32>
    %c0_7 = arith.constant 0 : index
    %c4 = arith.constant 4 : index
    %c0_8 = arith.constant 0 : index
    %4 = vector.load %arg1[%c0_7, %c4, %c0_8] : memref<1x32x128xf32, #tpu.memory_space<vmem>>, vector<1x16x128xf32>
    %5 = vector.shape_cast %4 : vector<1x16x128xf32> to vector<16x128xf32>
    %6 = arith.truncf %5 : vector<16x128xf32> to vector<16x128xbf16>
    %c0_9 = arith.constant 0 : index
    %c5 = arith.constant 5 : index
    %c0_10 = arith.constant 0 : index
    %7 = vector.load %arg1[%c0_9, %c5, %c0_10] : memref<1x32x128xf32, #tpu.memory_space<vmem>>, vector<1x16x128xf32>
    %8 = vector.shape_cast %7 : vector<1x16x128xf32> to vector<16x128xf32>
    %9 = arith.truncf %8 : vector<16x128xf32> to vector<16x128xbf16>
    %c0_11 = arith.constant 0 : index
    %c6 = arith.constant 6 : index
    %c0_12 = arith.constant 0 : index
    %10 = vector.load %arg1[%c0_11, %c6, %c0_12] : memref<1x32x128xf32, #tpu.memory_space<vmem>>, vector<1x16x128xf32>
    %11 = vector.shape_cast %10 : vector<1x16x128xf32> to vector<16x128xf32>
    %12 = arith.truncf %11 : vector<16x128xf32> to vector<16x128xbf16>
    %c0_13 = arith.constant 0 : index
    %c7 = arith.constant 7 : index
    %c0_14 = arith.constant 0 : index
    %13 = vector.load %arg1[%c0_13, %c7, %c0_14] : memref<1x32x128xf32, #tpu.memory_space<vmem>>, vector<1x16x128xf32>
    %14 = vector.shape_cast %13 : vector<1x16x128xf32> to vector<16x128xf32>
    %15 = arith.truncf %14 : vector<16x128xf32> to vector<16x128xbf16>
    %c0_15 = arith.constant 0 : index
    %c8 = arith.constant 8 : index
    %c0_16 = arith.constant 0 : index
    %16 = vector.load %arg1[%c0_15, %c8, %c0_16] : memref<1x32x128xf32, #tpu.memory_space<vmem>>, vector<1x16x128xf32>
    %17 = vector.shape_cast %16 : vector<1x16x128xf32> to vector<16x128xf32>
    %18 = arith.truncf %17 : vector<16x128xf32> to vector<16x128xbf16>
    %c0_17 = arith.constant 0 : index
    %c9 = arith.constant 9 : index
    %c0_18 = arith.constant 0 : index
    %19 = vector.load %arg1[%c0_17, %c9, %c0_18] : memref<1x32x128xf32, #tpu.memory_space<vmem>>, vector<1x16x128xf32>
    %20 = vector.shape_cast %19 : vector<1x16x128xf32> to vector<16x128xf32>
    %21 = arith.truncf %20 : vector<16x128xf32> to vector<16x128xbf16>
    %c0_19 = arith.constant 0 : index
    %c10 = arith.constant 10 : index
    %c0_20 = arith.constant 0 : index
    %22 = vector.load %arg1[%c0_19, %c10, %c0_20] : memref<1x32x128xf32, #tpu.memory_space<vmem>>, vector<1x16x128xf32>
    %23 = vector.shape_cast %22 : vector<1x16x128xf32> to vector<16x128xf32>
    %24 = arith.truncf %23 : vector<16x128xf32> to vector<16x128xbf16>
    %c0_21 = arith.constant 0 : index
    %c11 = arith.constant 11 : index
    %c0_22 = arith.constant 0 : index
    %25 = vector.load %arg1[%c0_21, %c11, %c0_22] : memref<1x32x128xf32, #tpu.memory_space<vmem>>, vector<1x16x128xf32>
    %26 = vector.shape_cast %25 : vector<1x16x128xf32> to vector<16x128xf32>
    %27 = arith.truncf %26 : vector<16x128xf32> to vector<16x128xbf16>
    %c0_23 = arith.constant 0 : index
    %c12 = arith.constant 12 : index
    %c0_24 = arith.constant 0 : index
    %28 = vector.load %arg1[%c0_23, %c12, %c0_24] : memref<1x32x128xf32, #tpu.memory_space<vmem>>, vector<1x16x128xf32>
    %29 = vector.shape_cast %28 : vector<1x16x128xf32> to vector<16x128xf32>
    %30 = arith.truncf %29 : vector<16x128xf32> to vector<16x128xbf16>
    %31 = tpu.concatenate %6, %9, %12, %15, %18, %21, %24, %27, %30 in 1 : vector<16x128xbf16>, vector<16x128xbf16>, vector<16x128xbf16>, vector<16x128xbf16>, vector<16x128xbf16>, vector<16x128xbf16>, vector<16x128xbf16>, vector<16x128xbf16>, vector<16x128xbf16> -> vector<16x1152xbf16>
    %cst = arith.constant dense<0.000000e+00> : vector<16x128xf32>
    %32 = tpu.matmul %31, %0, %cst {dimension_numbers = #tpu.dot_dimension_numbers<[1], [0], [0], [1], [0, 0, 1, 1], [], []>} : vector<16x1152xbf16>, vector<1152x128xbf16>, vector<16x128xf32> -> vector<16x128xf32>
    %33 = vector.broadcast %2 : vector<1x128xf32> to vector<16x128xf32>
    %34 = arith.addf %32, %33 : vector<16x128xf32>
    %cst_25 = arith.constant 2.000000e+01 : f32
    %35 = vector.broadcast %cst_25 : f32 to vector<16x128xf32>
    %36 = arith.minimumf %34, %35 : vector<16x128xf32>
    %37 = math.exp %36 : vector<16x128xf32>
    %cst_26 = arith.constant 2.000000e+00 : f32
    %38 = vector.broadcast %cst_26 : f32 to vector<16x128xf32>
    %39 = arith.addf %37, %38 : vector<16x128xf32>
    %40 = arith.mulf %37, %39 : vector<16x128xf32>
    %cst_27 = arith.constant 2.000000e+00 : f32
    %41 = vector.broadcast %cst_27 : f32 to vector<16x128xf32>
    %42 = arith.addf %40, %41 : vector<16x128xf32>
    %43 = tpu.reciprocal %42 {approx = true} : vector<16x128xf32> -> vector<16x128xf32>
    %44 = arith.mulf %40, %43 : vector<16x128xf32>
    %45 = arith.mulf %34, %44 : vector<16x128xf32>
    %46 = arith.truncf %45 : vector<16x128xf32> to vector<16x128xbf16>
    %cst_28 = arith.constant dense<0.000000e+00> : vector<16x128xf32>
    %47 = tpu.matmul %46, %1, %cst_28 {dimension_numbers = #tpu.dot_dimension_numbers<[1], [0], [0], [1], [0, 0, 1, 1], [], []>} : vector<16x128xbf16>, vector<128x128xbf16>, vector<16x128xf32> -> vector<16x128xf32>
    %48 = vector.broadcast %3 : vector<1x128xf32> to vector<16x128xf32>
    %49 = arith.addf %47, %48 : vector<16x128xf32>
    %c0_29 = arith.constant 0 : index
    %c8_30 = arith.constant 8 : index
    %c0_31 = arith.constant 0 : index
    %50 = vector.load %arg1[%c0_29, %c8_30, %c0_31] : memref<1x32x128xf32, #tpu.memory_space<vmem>>, vector<1x16x128xf32>
    %51 = vector.shape_cast %50 : vector<1x16x128xf32> to vector<16x128xf32>
    %52 = arith.addf %49, %51 : vector<16x128xf32>
    %c0_32 = arith.constant 0 : index
    %c0_33 = arith.constant 0 : index
    %c0_34 = arith.constant 0 : index
    %53 = vector.load %arg6[%c0_32, %c0_33, %c0_34] : memref<1x16x128xf32, #tpu.memory_space<vmem>>, vector<1x16x128xf32>
    %54 = vector.shape_cast %53 : vector<1x16x128xf32> to vector<16x128xf32>
    %55 = vector.shape_cast %52 : vector<16x128xf32> to vector<1x16x128xf32>
    tpu.vector_store %arg6[%c0_32, %c0_33, %c0_34], %55 {strides = array<i32>} : memref<1x16x128xf32, #tpu.memory_space<vmem>>, vector<1x16x128xf32>,
    return
  }
  func.func @transform_0(%arg0: i32) -> (i32, i32, i32) {
    %c0_i32 = arith.constant 0 : i32
    %c0_i32_0 = arith.constant 0 : i32
    %c0_i32_1 = arith.constant 0 : i32
    return %arg0, %c0_i32, %c0_i32_0 : i32, i32, i32
  }
  func.func @transform_1(%arg0: i32) -> (i32, i32) {
    %c0_i32 = arith.constant 0 : i32
    %c0_i32_0 = arith.constant 0 : i32
    %c0_i32_1 = arith.constant 0 : i32
    return %c0_i32, %c0_i32_0 : i32, i32
  }
  func.func @transform_2(%arg0: i32) -> (i32, i32) {
    %c0_i32 = arith.constant 0 : i32
    %c0_i32_0 = arith.constant 0 : i32
    %c0_i32_1 = arith.constant 0 : i32
    return %c0_i32, %c0_i32_0 : i32, i32
  }
  func.func @transform_3(%arg0: i32) -> (i32, i32) {
    %c0_i32 = arith.constant 0 : i32
    %c0_i32_0 = arith.constant 0 : i32
    %c0_i32_1 = arith.constant 0 : i32
    return %c0_i32, %c0_i32_0 : i32, i32
  }
  func.func @transform_4(%arg0: i32) -> (i32, i32) {
    %c0_i32 = arith.constant 0 : i32
    %c0_i32_0 = arith.constant 0 : i32
    %c0_i32_1 = arith.constant 0 : i32
    return %c0_i32, %c0_i32_0 : i32, i32
  }
  func.func @transform_5(%arg0: i32) -> (i32, i32, i32) {
    %c0_i32 = arith.constant 0 : i32
    %c0_i32_0 = arith.constant 0 : i32
    %c0_i32_1 = arith.constant 0 : i32
    return %arg0, %c0_i32, %c0_i32_0 : i32, i32, i32
  }
}

</mosaic_0001>

<llo_original>
// kernel: tpu_custom_call.1
$region0: #{tpu_custom_call.1}
  #allocation0 [shape = 'u32[]', space=smem, size = 0x4, offset = 0x4, fixed_abs, tag = 'smem constant byte address 0x4 - core index']
  #allocation1 [shape = 'u32[144,128]{1,0:T(1,128)}', space=vmem, size = 0x12000, scoped, tag = 'internal scratch']
  %s0 = inlined_call_operand.hbm [shape: f32[2,32,128], index: 0, kind: input, shape index: {}]
  %s1 = inlined_call_operand.hbm [shape: bf16[1152,128], index: 1, kind: input, shape index: {}]
  %s2 = inlined_call_operand.vmem [shape: f32[1,128], index: 2, kind: input, shape index: {}]
  %s3 = inlined_call_operand.hbm [shape: bf16[128,128], index: 3, kind: input, shape index: {}]
  %s4 = inlined_call_operand.vmem [shape: f32[1,128], index: 4, kind: input, shape index: {}]
  %s5 = inlined_call_operand.hbm [shape: f32[2,16,128], index: 5, kind: output, shape index: {}]
  %s6 = sld [smem:[#allocation0]]
  $region65: #{tpu_custom_call.1} parent=0
    _
  %s8 = ssub.s32 1, %s6
  %s9 = scalar_select 0, %s8, %s6
  $region1: #{tpu_custom_call.1} parent=0
    #allocation2 [shape = 'u8[32768]{0}', space=vmem, size = 0x8000, scoped, tag = 'input window, operand 0']
    #allocation3 [shape = 's32[2]{0}', space=sflag, size = 0x8, scoped, tag = 'scoped memory for tpu_custom_call.1']
    #allocation4 [shape = 's32[2]{0}', space=sflag, size = 0x8, scoped, tag = 'scoped memory for tpu_custom_call.1']
    #allocation5 [shape = 'u8[294912]{0}', space=vmem, size = 0x48000, scoped, tag = 'input window, operand 1, single buffered']
    #allocation6 [shape = 's32[1]{0}', space=sflag, size = 0x4, scoped, tag = 'scoped memory for tpu_custom_call.1']
    #allocation7 [shape = 'u8[32768]{0}', space=vmem, size = 0x8000, scoped, tag = 'input window, operand 3, single buffered']
    #allocation8 [shape = 'u8[16384]{0}', space=vmem, size = 0x4000, scoped, tag = 'output window, operand 0']
    %10 = vsyncpa [#allocation3], 0
    %s11 = scalar_lea.sflag [#allocation3], 1
    %12 = vsyncpa %s11, 0
    %13 = vsyncpa [#allocation6], 0
    %14 = vsyncpa [#allocation4], 0
    %s15 = scalar_lea.sflag [#allocation4], 1
    %16 = vsyncpa %s15, 0
    loop: start=0, step=1, limit=4
    $region2: #{tpu_custom_call.1} parent=1 // loop_pre_header
      _
    $region3: #{tpu_custom_call.1} parent=1 // loop_header
      %s18 = sphi 0, %s22
      %p19 = scmp.ge.s32.totalorder %s18, 4
      %s28 = sphi 0, %s30
      %s31 = sphi 0, %s28
      %s32 = sphi 0, %s31
      %s48 = sphi 0, %s32
      %s52 = sphi 0, %s52
      %s54 = sphi 0, %s52
      %s55 = sphi 0, %s54
      %s69 = sphi 0, %s55
      %s73 = sphi 0, %s73
      %s75 = sphi 0, %s73
      %s76 = sphi 0, %s75
      %s90 = sphi 0, %s76
      %s94 = sphi 0, %s94
      %s96 = sphi 0, %s94
      %s97 = sphi 0, %s96
      %s111 = sphi 0, %s97
      %s115 = sphi 0, %s115
      %s117 = sphi 0, %s115
      %s118 = sphi 0, %s117
      %s132 = sphi 0, %s118
      %s138 = sphi 0, %s140
      %s141 = sphi 0, %s138
      %s142 = sphi 0, %s141
      %s158 = sphi 0, %s142
    $region4: #{tpu_custom_call.1} parent=1 // loop_header_branch
      %21 = sbr.rel (%p19) target = $region8
    $region5: #{tpu_custom_call.1} parent=1 // loop_body
      %s23 = ssub.s32 %s18, 1
      %s24 = ssub.s32 %s18, 2
      %s25 = sadd.s32 %s18, 1
      %s26 = ssub.s32 %s18, %s25
      %p27 = scmp.eq.s32.totalorder %s26, 0
      %s29 = sadd.s32 %s28, 1
      %s30 = scalar_select %p27, %s28, %s29
      %p33 = pneg %p27
      %p34 = scmp.eq.s32.totalorder %s18, 1
      %p35 = por %p33, %p34
      %p36 = scmp.ne.s32.totalorder %s28, %s31
      %p37 = scmp.eq.s32.totalorder %s18, 0
      %p38 = por %p36, %p37
      %p39 = scmp.ne.s32.totalorder %s28, %s31
      %p40 = scmp.eq.s32.totalorder %s23, 1
      %p41 = por %p39, %p40
      %p42 = scmp.ne.s32.totalorder %s31, %s32
      %p43 = scmp.eq.s32.totalorder %s23, 0
      %p44 = por %p42, %p43
      %p45 = scmp.ne.s32.totalorder %s31, %s32
      %p46 = scmp.eq.s32.totalorder %s24, 1
      %p47 = por %p45, %p46
      %p49 = scmp.ne.s32.totalorder %s32, %s48
      %p50 = scmp.eq.s32.totalorder %s24, 0
      %p51 = por %p49, %p50
      %s53 = sadd.s32 %s52, 1
      %p56 = scmp.eq.s32.totalorder %s18, 1
      %p57 = scmp.ne.s32.totalorder %s52, %s54
      %p58 = scmp.eq.s32.totalorder %s18, 0
      %p59 = por %p57, %p58
      %p60 = scmp.ne.s32.totalorder %s52, %s54
      %p61 = scmp.eq.s32.totalorder %s23, 1
      %p62 = por %p60, %p61
      %p63 = scmp.ne.s32.totalorder %s54, %s55
      %p64 = scmp.eq.s32.totalorder %s23, 0
      %p65 = por %p63, %p64
      %p66 = scmp.ne.s32.totalorder %s54, %s55
      %p67 = scmp.eq.s32.totalorder %s24, 1
      %p68 = por %p66, %p67
      %p70 = scmp.ne.s32.totalorder %s55, %s69
      %p71 = scmp.eq.s32.totalorder %s24, 0
      %p72 = por %p70, %p71
      %s74 = sadd.s32 %s73, 1
      %p77 = scmp.eq.s32.totalorder %s18, 1
      %p78 = scmp.ne.s32.totalorder %s73, %s75
      %p79 = scmp.eq.s32.totalorder %s18, 0
      %p80 = por %p78, %p79
      %p81 = scmp.ne.s32.totalorder %s73, %s75
      %p82 = scmp.eq.s32.totalorder %s23, 1
      %p83 = por %p81, %p82
      %p84 = scmp.ne.s32.totalorder %s75, %s76
      %p85 = scmp.eq.s32.totalorder %s23, 0
      %p86 = por %p84, %p85
      %p87 = scmp.ne.s32.totalorder %s75, %s76
      %p88 = scmp.eq.s32.totalorder %s24, 1
      %p89 = por %p87, %p88
      %p91 = scmp.ne.s32.totalorder %s76, %s90
      %p92 = scmp.eq.s32.totalorder %s24, 0
      %p93 = por %p91, %p92
      %s95 = sadd.s32 %s94, 1
      %p98 = scmp.eq.s32.totalorder %s18, 1
      %p99 = scmp.ne.s32.totalorder %s94, %s96
      %p100 = scmp.eq.s32.totalorder %s18, 0
      %p101 = por %p99, %p100
      %p102 = scmp.ne.s32.totalorder %s94, %s96
      %p103 = scmp.eq.s32.totalorder %s23, 1
      %p104 = por %p102, %p103
      %p105 = scmp.ne.s32.totalorder %s96, %s97
      %p106 = scmp.eq.s32.totalorder %s23, 0
      %p107 = por %p105, %p106
      %p108 = scmp.ne.s32.totalorder %s96, %s97
      %p109 = scmp.eq.s32.totalorder %s24, 1
      %p110 = por %p108, %p109
      %p112 = scmp.ne.s32.totalorder %s97, %s111
      %p113 = scmp.eq.s32.totalorder %s24, 0
      %p114 = por %p112, %p113
      %s116 = sadd.s32 %s115, 1
      %p119 = scmp.eq.s32.totalorder %s18, 1
      %p120 = scmp.ne.s32.totalorder %s115, %s117
      %p121 = scmp.eq.s32.totalorder %s18, 0
      %p122 = por %p120, %p121
      %p123 = scmp.ne.s32.totalorder %s115, %s117
      %p124 = scmp.eq.s32.totalorder %s23, 1
      %p125 = por %p123, %p124
      %p126 = scmp.ne.s32.totalorder %s117, %s118
      %p127 = scmp.eq.s32.totalorder %s23, 0
      %p128 = por %p126, %p127
      %p129 = scmp.ne.s32.totalorder %s117, %s118
      %p130 = scmp.eq.s32.totalorder %s24, 1
      %p131 = por %p129, %p130
      %p133 = scmp.ne.s32.totalorder %s118, %s132
      %p134 = scmp.eq.s32.totalorder %s24, 0
      %p135 = por %p133, %p134
      %s136 = ssub.s32 %s18, %s25
      %p137 = scmp.eq.s32.totalorder %s136, 0
      %s139 = sadd.s32 %s138, 1
      %s140 = scalar_select %p137, %s138, %s139
      %p143 = pneg %p137
      %p144 = scmp.eq.s32.totalorder %s18, 1
      %p145 = por %p143, %p144
      %p146 = scmp.ne.s32.totalorder %s138, %s141
      %p147 = scmp.eq.s32.totalorder %s18, 0
      %p148 = por %p146, %p147
      %p149 = scmp.ne.s32.totalorder %s138, %s141
      %p150 = scmp.eq.s32.totalorder %s23, 1
      %p151 = por %p149, %p150
      %p152 = scmp.ne.s32.totalorder %s141, %s142
      %p153 = scmp.eq.s32.totalorder %s23, 0
      %p154 = por %p152, %p153
      %p155 = scmp.ne.s32.totalorder %s141, %s142
      %p156 = scmp.eq.s32.totalorder %s24, 1
      %p157 = por %p155, %p156
      %p159 = scmp.ne.s32.totalorder %s142, %s158
      %p160 = scmp.eq.s32.totalorder %s24, 0
      %p161 = por %p159, %p160
      %p162 = scmp.le.s32.totalorder 1, %s18
      %p163 = scmp.lt.s32.totalorder %s18, 3
      %p164 = pnand %p162, %p163
      %p165 = pneg %p164
      // Predicated region
      $region9: #{tpu_custom_call.1} parent=5 // pred_check
        _
      $region10: #{tpu_custom_call.1} parent=5 // pred_check_branch
        %167 = sbr.rel (%p164) target = $region12
      $region11: #{tpu_custom_call.1} parent=5 // pred_region
        %s168 = ssub.s32 %s18, 1
        // Predicated region
        $region13: #{tpu_custom_call.1} parent=11 // pred_check
          %p169 = pneg %p65
        $region14: #{tpu_custom_call.1} parent=11 // pred_check_branch
          %171 = sbr.rel (%p169) target = $region16
        $region15: #{tpu_custom_call.1} parent=11 // pred_region
          %s173 = ssub.s32 9216, 9216
          %174 = vsyncadd [#allocation6], %s173
          %s175 = sshll.u32 [#allocation5], 4
          %s176 = int_to_ptr.vmem [resolvable:$true] %s175
          %181 = dma.hbm_to_vmem [thread:$0]  %s1, 9216, %s176, [#allocation6], 64, 64, 4
        $region16: #{tpu_custom_call.1} parent=11 // pred_fallthru
          _
        // Predicated region
        $region17: #{tpu_custom_call.1} parent=11 // pred_check
          %p182 = pneg %p86
        $region18: #{tpu_custom_call.1} parent=11 // pred_check_branch
          %184 = sbr.rel (%p182) target = $region20
        $region19: #{tpu_custom_call.1} parent=11 // pred_region
          _
        $region20: #{tpu_custom_call.1} parent=11 // pred_fallthru
          _
        // Predicated region
        $region21: #{tpu_custom_call.1} parent=11 // pred_check
          %p185 = pneg %p107
        $region22: #{tpu_custom_call.1} parent=11 // pred_check_branch
          %187 = sbr.rel (%p185) target = $region24
        $region23: #{tpu_custom_call.1} parent=11 // pred_region
          %s189 = ssub.s32 1024, 1024
          %190 = vsyncadd [#allocation6], %s189
          %s191 = sshll.u32 [#allocation7], 4
          %s192 = int_to_ptr.vmem [resolvable:$true] %s191
          %197 = dma.hbm_to_vmem [thread:$0]  %s3, 1024, %s192, [#allocation6], 64, 64, 4
        $region24: #{tpu_custom_call.1} parent=11 // pred_fallthru
          _
        // Predicated region
        $region25: #{tpu_custom_call.1} parent=11 // pred_check
          %p198 = pneg %p128
        $region26: #{tpu_custom_call.1} parent=11 // pred_check_branch
          %200 = sbr.rel (%p198) target = $region28
        $region27: #{tpu_custom_call.1} parent=11 // pred_region
          _
        $region28: #{tpu_custom_call.1} parent=11 // pred_fallthru
          _
      $region12: #{tpu_custom_call.1} parent=5 // pred_fallthru
        _
      %p201 = scmp.lt.s32.totalorder %s18, 2
      // Predicated region
      $region29: #{tpu_custom_call.1} parent=5 // pred_check
        %p202 = pneg %p201
      $region30: #{tpu_custom_call.1} parent=5 // pred_check_branch
        %204 = sbr.rel (%p202) target = $region32
      $region31: #{tpu_custom_call.1} parent=5 // pred_region
        // Predicated region
        $region33: #{tpu_custom_call.1} parent=31 // pred_check
          %p205 = pneg %p38
        $region34: #{tpu_custom_call.1} parent=31 // pred_check_branch
          %207 = sbr.rel (%p205) target = $region36
        $region35: #{tpu_custom_call.1} parent=31 // pred_region
          %s208 = sand.u32 %s28, 1
          %s209 = scalar_lea.sflag [#allocation3], %s208
          %s210 = sand.u32 %s28, 1
          %s211 = smul.addr %s210, 32
          %s212 = scalar_lea.vmem [#allocation2], %s211
          %s214 = ssub.s32 512, 512
          %215 = vsyncadd %s209, %s214
          %s216 = smul.addr %s18, 4
          %s217 = smul.addr %s216, 128
          %s218 = scalar_lea.hbm %s0, %s217
          %s219 = sshll.u32 %s212, 4
          %s220 = int_to_ptr.vmem [resolvable:$true] %s219
          %225 = dma.hbm_to_vmem [thread:$0]  %s218, 512, %s220, %s209, 128, 128, 8
        $region36: #{tpu_custom_call.1} parent=31 // pred_fallthru
          _
      $region32: #{tpu_custom_call.1} parent=5 // pred_fallthru
        _
      %p226 = scmp.le.s32.totalorder 1, %s18
      %p227 = scmp.lt.s32.totalorder %s18, 3
      %p228 = pnand %p226, %p227
      %p229 = pneg %p228
      // Predicated region
      $region37: #{tpu_custom_call.1} parent=5 // pred_check
        _
      $region38: #{tpu_custom_call.1} parent=5 // pred_check_branch
        %231 = sbr.rel (%p228) target = $region40
      $region39: #{tpu_custom_call.1} parent=5 // pred_region
        %s232 = ssub.s32 %s18, 1
        %s233 = sand.u32 %s31, 1
        %s234 = scalar_lea.sflag [#allocation3], %s233
        %s235 = sand.u32 %s31, 1
        %s236 = smul.addr %s235, 32
        %s237 = scalar_lea.vmem [#allocation2], %s236
        // Predicated region
        $region41: #{tpu_custom_call.1} parent=39 // pred_check
          %p238 = pneg %p44
        $region42: #{tpu_custom_call.1} parent=39 // pred_check_branch
          %240 = sbr.rel (%p238) target = $region44
        $region43: #{tpu_custom_call.1} parent=39 // pred_region
          %241 = dma.done %s234, 512
        $region44: #{tpu_custom_call.1} parent=39 // pred_fallthru
          _
        // Predicated region
        $region45: #{tpu_custom_call.1} parent=39 // pred_check
          %p242 = pneg %p65
        $region46: #{tpu_custom_call.1} parent=39 // pred_check_branch
          %244 = sbr.rel (%p242) target = $region48
        $region47: #{tpu_custom_call.1} parent=39 // pred_region
          %245 = dma.done [#allocation6], 9216
        $region48: #{tpu_custom_call.1} parent=39 // pred_fallthru
          _
        // Predicated region
        $region49: #{tpu_custom_call.1} parent=39 // pred_check
          %p246 = pneg %p107
        $region50: #{tpu_custom_call.1} parent=39 // pred_check_branch
          %248 = sbr.rel (%p246) target = $region52
        $region51: #{tpu_custom_call.1} parent=39 // pred_region
          %249 = dma.done [#allocation6], 1024
        $region52: #{tpu_custom_call.1} parent=39 // pred_fallthru
          _
        %s250 = sand.u32 %s31, 1
        %s251 = scalar_lea.sflag [#allocation3], %s250
        %s252 = sand.u32 %s31, 1
        %s253 = smul.addr %s252, 32
        %s254 = scalar_lea.vmem [#allocation2], %s253
        %p255 = pneg %p44
        %p256 = pneg %p41
        %p257 = pneg %p65
        %p258 = pneg %p62
        %p259 = pneg %p86
        %p260 = pneg %p83
        %p261 = pneg %p107
        %p262 = pneg %p104
        %p263 = pneg %p128
        %p264 = pneg %p125
        %p265 = pneg %p154
        %p266 = pneg %p151
        %s267 = sand.u32 %s141, 1
        %s268 = scalar_lea.sflag [#allocation4], %s267
        %s269 = sand.u32 %s141, 1
        %s270 = smul.addr %s269, 16
        %s271 = scalar_lea.vmem [#allocation8], %s270
        %v273 = vld [vmem:[#allocation5] sm:$0xf]
        %v274 = vld [vmem:[#allocation5 + $0x4] sm:$0xf]
        %v275 = vld [vmem:[#allocation5 + $0x8] sm:$0xf]
        %v276 = vld [vmem:[#allocation5 + $0xc] sm:$0xf]
        %v277 = vld [vmem:[#allocation5 + $0x10] sm:$0xf]
        %v278 = vld [vmem:[#allocation5 + $0x14] sm:$0xf]
        %v279 = vld [vmem:[#allocation5 + $0x18] sm:$0xf]
        %v280 = vld [vmem:[#allocation5 + $0x1c] sm:$0xf]
        %v281 = vld [vmem:[#allocation5 + $0x20] sm:$0xf]
        %v282 = vld [vmem:[#allocation5 + $0x24] sm:$0xf]
        %v283 = vld [vmem:[#allocation5 + $0x28] sm:$0xf]
        %v284 = vld [vmem:[#allocation5 + $0x2c] sm:$0xf]
        %v285 = vld [vmem:[#allocation5 + $0x30] sm:$0xf]
        %v286 = vld [vmem:[#allocation5 + $0x34] sm:$0xf]
        %v287 = vld [vmem:[#allocation5 + $0x38] sm:$0xf]
        %v288 = vld [vmem:[#allocation5 + $0x3c] sm:$0xf]
        %v289 = vld [vmem:[#allocation5 + $0x40] sm:$0xf]
        %v290 = vld [vmem:[#allocation5 + $0x44] sm:$0xf]
        %v291 = vld [vmem:[#allocation5 + $0x48] sm:$0xf]
        %v292 = vld [vmem:[#allocation5 + $0x4c] sm:$0xf]
        %v293 = vld [vmem:[#allocation5 + $0x50] sm:$0xf]
        %v294 = vld [vmem:[#allocation5 + $0x54] sm:$0xf]
        %v295 = vld [vmem:[#allocation5 + $0x58] sm:$0xf]
        %v296 = vld [vmem:[#allocation5 + $0x5c] sm:$0xf]
        %v297 = vld [vmem:[#allocation5 + $0x60] sm:$0xf]
        %v298 = vld [vmem:[#allocation5 + $0x64] sm:$0xf]
        %v299 = vld [vmem:[#allocation5 + $0x68] sm:$0xf]
        %v300 = vld [vmem:[#allocation5 + $0x6c] sm:$0xf]
        %v301 = vld [vmem:[#allocation5 + $0x70] sm:$0xf]
        %v302 = vld [vmem:[#allocation5 + $0x74] sm:$0xf]
        %v303 = vld [vmem:[#allocation5 + $0x78] sm:$0xf]
        %v304 = vld [vmem:[#allocation5 + $0x7c] sm:$0xf]
        %v305 = vld [vmem:[#allocation5 + $0x80] sm:$0xf]
        %v306 = vld [vmem:[#allocation5 + $0x84] sm:$0xf]
        %v307 = vld [vmem:[#allocation5 + $0x88] sm:$0xf]
        %v308 = vld [vmem:[#allocation5 + $0x8c] sm:$0xf]
        %v309 = vld [vmem:[#allocation5 + $0x90] sm:$0xf]
        %v310 = vld [vmem:[#allocation5 + $0x94] sm:$0xf]
        %v311 = vld [vmem:[#allocation5 + $0x98] sm:$0xf]
        %v312 = vld [vmem:[#allocation5 + $0x9c] sm:$0xf]
        %v313 = vld [vmem:[#allocation5 + $0xa0] sm:$0xf]
        %v314 = vld [vmem:[#allocation5 + $0xa4] sm:$0xf]
        %v315 = vld [vmem:[#allocation5 + $0xa8] sm:$0xf]
        %v316 = vld [vmem:[#allocation5 + $0xac] sm:$0xf]
        %v317 = vld [vmem:[#allocation5 + $0xb0] sm:$0xf]
        %v318 = vld [vmem:[#allocation5 + $0xb4] sm:$0xf]
        %v319 = vld [vmem:[#allocation5 + $0xb8] sm:$0xf]
        %v320 = vld [vmem:[#allocation5 + $0xbc] sm:$0xf]
        %v321 = vld [vmem:[#allocation5 + $0xc0] sm:$0xf]
        %v322 = vld [vmem:[#allocation5 + $0xc4] sm:$0xf]
        %v323 = vld [vmem:[#allocation5 + $0xc8] sm:$0xf]
        %v324 = vld [vmem:[#allocation5 + $0xcc] sm:$0xf]
        %v325 = vld [vmem:[#allocation5 + $0xd0] sm:$0xf]
        %v326 = vld [vmem:[#allocation5 + $0xd4] sm:$0xf]
        %v327 = vld [vmem:[#allocation5 + $0xd8] sm:$0xf]
        %v328 = vld [vmem:[#allocation5 + $0xdc] sm:$0xf]
        %v329 = vld [vmem:[#allocation5 + $0xe0] sm:$0xf]
        %v330 = vld [vmem:[#allocation5 + $0xe4] sm:$0xf]
        %v331 = vld [vmem:[#allocation5 + $0xe8] sm:$0xf]
        %v332 = vld [vmem:[#allocation5 + $0xec] sm:$0xf]
        %v333 = vld [vmem:[#allocation5 + $0xf0] sm:$0xf]
        %v334 = vld [vmem:[#allocation5 + $0xf4] sm:$0xf]
        %v335 = vld [vmem:[#allocation5 + $0xf8] sm:$0xf]
        %v336 = vld [vmem:[#allocation5 + $0xfc] sm:$0xf]
        %v337 = vld [vmem:[#allocation5 + $0x100] sm:$0xf]
        %v338 = vld [vmem:[#allocation5 + $0x104] sm:$0xf]
        %v339 = vld [vmem:[#allocation5 + $0x108] sm:$0xf]
        %v340 = vld [vmem:[#allocation5 + $0x10c] sm:$0xf]
        %v341 = vld [vmem:[#allocation5 + $0x110] sm:$0xf]
        %v342 = vld [vmem:[#allocation5 + $0x114] sm:$0xf]
        %v343 = vld [vmem:[#allocation5 + $0x118] sm:$0xf]
        %v344 = vld [vmem:[#allocation5 + $0x11c] sm:$0xf]
        %v345 = vld [vmem:[#allocation5 + $0x120] sm:$0xf]
        %v346 = vld [vmem:[#allocation5 + $0x124] sm:$0xf]
        %v347 = vld [vmem:[#allocation5 + $0x128] sm:$0xf]
        %v348 = vld [vmem:[#allocation5 + $0x12c] sm:$0xf]
        %v349 = vld [vmem:[#allocation5 + $0x130] sm:$0xf]
        %v350 = vld [vmem:[#allocation5 + $0x134] sm:$0xf]
        %v351 = vld [vmem:[#allocation5 + $0x138] sm:$0xf]
        %v352 = vld [vmem:[#allocation5 + $0x13c] sm:$0xf]
        %v353 = vld [vmem:[#allocation5 + $0x140] sm:$0xf]
        %v354 = vld [vmem:[#allocation5 + $0x144] sm:$0xf]
        %v355 = vld [vmem:[#allocation5 + $0x148] sm:$0xf]
        %v356 = vld [vmem:[#allocation5 + $0x14c] sm:$0xf]
        %v357 = vld [vmem:[#allocation5 + $0x150] sm:$0xf]
        %v358 = vld [vmem:[#allocation5 + $0x154] sm:$0xf]
        %v359 = vld [vmem:[#allocation5 + $0x158] sm:$0xf]
        %v360 = vld [vmem:[#allocation5 + $0x15c] sm:$0xf]
        %v361 = vld [vmem:[#allocation5 + $0x160] sm:$0xf]
        %v362 = vld [vmem:[#allocation5 + $0x164] sm:$0xf]
        %v363 = vld [vmem:[#allocation5 + $0x168] sm:$0xf]
        %v364 = vld [vmem:[#allocation5 + $0x16c] sm:$0xf]
        %v365 = vld [vmem:[#allocation5 + $0x170] sm:$0xf]
        %v366 = vld [vmem:[#allocation5 + $0x174] sm:$0xf]
        %v367 = vld [vmem:[#allocation5 + $0x178] sm:$0xf]
        %v368 = vld [vmem:[#allocation5 + $0x17c] sm:$0xf]
        %v369 = vld [vmem:[#allocation5 + $0x180] sm:$0xf]
        %v370 = vld [vmem:[#allocation5 + $0x184] sm:$0xf]
        %v371 = vld [vmem:[#allocation5 + $0x188] sm:$0xf]
        %v372 = vld [vmem:[#allocation5 + $0x18c] sm:$0xf]
        %v373 = vld [vmem:[#allocation5 + $0x190] sm:$0xf]
        %v374 = vld [vmem:[#allocation5 + $0x194] sm:$0xf]
        %v375 = vld [vmem:[#allocation5 + $0x198] sm:$0xf]
        %v376 = vld [vmem:[#allocation5 + $0x19c] sm:$0xf]
        %v377 = vld [vmem:[#allocation5 + $0x1a0] sm:$0xf]
        %v378 = vld [vmem:[#allocation5 + $0x1a4] sm:$0xf]
        %v379 = vld [vmem:[#allocation5 + $0x1a8] sm:$0xf]
        %v380 = vld [vmem:[#allocation5 + $0x1ac] sm:$0xf]
        %v381 = vld [vmem:[#allocation5 + $0x1b0] sm:$0xf]
        %v382 = vld [vmem:[#allocation5 + $0x1b4] sm:$0xf]
        %v383 = vld [vmem:[#allocation5 + $0x1b8] sm:$0xf]
        %v384 = vld [vmem:[#allocation5 + $0x1bc] sm:$0xf]
        %v385 = vld [vmem:[#allocation5 + $0x1c0] sm:$0xf]
        %v386 = vld [vmem:[#allocation5 + $0x1c4] sm:$0xf]
        %v387 = vld [vmem:[#allocation5 + $0x1c8] sm:$0xf]
        %v388 = vld [vmem:[#allocation5 + $0x1cc] sm:$0xf]
        %v389 = vld [vmem:[#allocation5 + $0x1d0] sm:$0xf]
        %v390 = vld [vmem:[#allocation5 + $0x1d4] sm:$0xf]
        %v391 = vld [vmem:[#allocation5 + $0x1d8] sm:$0xf]
        %v392 = vld [vmem:[#allocation5 + $0x1dc] sm:$0xf]
        %v393 = vld [vmem:[#allocation5 + $0x1e0] sm:$0xf]
        %v394 = vld [vmem:[#allocation5 + $0x1e4] sm:$0xf]
        %v395 = vld [vmem:[#allocation5 + $0x1e8] sm:$0xf]
        %v396 = vld [vmem:[#allocation5 + $0x1ec] sm:$0xf]
        %v397 = vld [vmem:[#allocation5 + $0x1f0] sm:$0xf]
        %v398 = vld [vmem:[#allocation5 + $0x1f4] sm:$0xf]
        %v399 = vld [vmem:[#allocation5 + $0x1f8] sm:$0xf]
        %v400 = vld [vmem:[#allocation5 + $0x1fc] sm:$0xf]
        %v401 = vld [vmem:[#allocation5 + $0x200] sm:$0xf]
        %v402 = vld [vmem:[#allocation5 + $0x204] sm:$0xf]
        %v403 = vld [vmem:[#allocation5 + $0x208] sm:$0xf]
        %v404 = vld [vmem:[#allocation5 + $0x20c] sm:$0xf]
        %v405 = vld [vmem:[#allocation5 + $0x210] sm:$0xf]
        %v406 = vld [vmem:[#allocation5 + $0x214] sm:$0xf]
        %v407 = vld [vmem:[#allocation5 + $0x218] sm:$0xf]
        %v408 = vld [vmem:[#allocation5 + $0x21c] sm:$0xf]
        %v409 = vld [vmem:[#allocation5 + $0x220] sm:$0xf]
        %v410 = vld [vmem:[#allocation5 + $0x224] sm:$0xf]
        %v411 = vld [vmem:[#allocation5 + $0x228] sm:$0xf]
        %v412 = vld [vmem:[#allocation5 + $0x22c] sm:$0xf]
        %v413 = vld [vmem:[#allocation5 + $0x230] sm:$0xf]
        %v414 = vld [vmem:[#allocation5 + $0x234] sm:$0xf]
        %v415 = vld [vmem:[#allocation5 + $0x238] sm:$0xf]
        %v416 = vld [vmem:[#allocation5 + $0x23c] sm:$0xf]
        %v417 = vld [vmem:[#allocation7] sm:$0xf]
        %v418 = vld [vmem:[#allocation7 + $0x4] sm:$0xf]
        %v419 = vld [vmem:[#allocation7 + $0x8] sm:$0xf]
        %v420 = vld [vmem:[#allocation7 + $0xc] sm:$0xf]
        %v421 = vld [vmem:[#allocation7 + $0x10] sm:$0xf]
        %v422 = vld [vmem:[#allocation7 + $0x14] sm:$0xf]
        %v423 = vld [vmem:[#allocation7 + $0x18] sm:$0xf]
        %v424 = vld [vmem:[#allocation7 + $0x1c] sm:$0xf]
        %v425 = vld [vmem:[#allocation7 + $0x20] sm:$0xf]
        %v426 = vld [vmem:[#allocation7 + $0x24] sm:$0xf]
        %v427 = vld [vmem:[#allocation7 + $0x28] sm:$0xf]
        %v428 = vld [vmem:[#allocation7 + $0x2c] sm:$0xf]
        %v429 = vld [vmem:[#allocation7 + $0x30] sm:$0xf]
        %v430 = vld [vmem:[#allocation7 + $0x34] sm:$0xf]
        %v431 = vld [vmem:[#allocation7 + $0x38] sm:$0xf]
        %v432 = vld [vmem:[#allocation7 + $0x3c] sm:$0xf]
        %v433 = vld [vmem:[%s2] sm:$0x1]
        %v434 = vld [vmem:[%s4] sm:$0x1]
        %v435 = vld [vmem:[%s237 + $0x4] sm:$0xff]
        %v436 = vld [vmem:[%s237 + $0xc] sm:$0xff]
        %v437 = vpack.c.bf16 %v436, %v435
        %v438 = vld [vmem:[%s237 + $0x5] sm:$0xff]
        %v439 = vld [vmem:[%s237 + $0xd] sm:$0xff]
        %v440 = vpack.c.bf16 %v439, %v438
        %v441 = vld [vmem:[%s237 + $0x6] sm:$0xff]
        %v442 = vld [vmem:[%s237 + $0xe] sm:$0xff]
        %v443 = vpack.c.bf16 %v442, %v441
        %v444 = vld [vmem:[%s237 + $0x7] sm:$0xff]
        %v445 = vld [vmem:[%s237 + $0xf] sm:$0xff]
        %v446 = vpack.c.bf16 %v445, %v444
        %v447 = vld [vmem:[%s237 + $0x8] sm:$0xff]
        %v448 = vld [vmem:[%s237 + $0x10] sm:$0xff]
        %v449 = vpack.c.bf16 %v448, %v447
        %v450 = vld [vmem:[%s237 + $0x9] sm:$0xff]
        %v451 = vld [vmem:[%s237 + $0x11] sm:$0xff]
        %v452 = vpack.c.bf16 %v451, %v450
        %v453 = vld [vmem:[%s237 + $0xa] sm:$0xff]
        %v454 = vld [vmem:[%s237 + $0x12] sm:$0xff]
        %v455 = vpack.c.bf16 %v454, %v453
        %v456 = vld [vmem:[%s237 + $0xb] sm:$0xff]
        %v457 = vld [vmem:[%s237 + $0x13] sm:$0xff]
        %v458 = vpack.c.bf16 %v457, %v456
        %v459 = vld [vmem:[%s237 + $0x14] sm:$0xff]
        %v460 = vpack.c.bf16 %v459, %v436
        %v462 = vlaneseq
        %v463 = vshrl.u32 %v462, 7
        %v464 = vsub.s32 0, %v463
        %v465 = vrot.slane %v433, %v464
        %v611 = vunpack.c.l.b16 %v273
        %v612 = vunpack.c.l.b16 %v274
        %v613 = vunpack.c.l.b16 %v275
        %v614 = vunpack.c.l.b16 %v276
        %v615 = vunpack.c.l.b16 %v277
        %v616 = vunpack.c.l.b16 %v278
        %v617 = vunpack.c.l.b16 %v279
        %v618 = vunpack.c.l.b16 %v280
        %v619 = vunpack.c.l.b16 %v281
        %v620 = vunpack.c.l.b16 %v282
        %v621 = vunpack.c.l.b16 %v283
        %v622 = vunpack.c.l.b16 %v284
        %v623 = vunpack.c.l.b16 %v285
        %v624 = vunpack.c.l.b16 %v286
        %v625 = vunpack.c.l.b16 %v287
        %v626 = vunpack.c.l.b16 %v288
        %v627 = vunpack.c.l.b16 %v289
        %v628 = vunpack.c.l.b16 %v290
        %v629 = vunpack.c.l.b16 %v291
        %v630 = vunpack.c.l.b16 %v292
        %v631 = vunpack.c.l.b16 %v293
        %v632 = vunpack.c.l.b16 %v294
        %v633 = vunpack.c.l.b16 %v295
        %v634 = vunpack.c.l.b16 %v296
        %v635 = vunpack.c.l.b16 %v297
        %v636 = vunpack.c.l.b16 %v298
        %v637 = vunpack.c.l.b16 %v299
        %v638 = vunpack.c.l.b16 %v300
        %v639 = vunpack.c.l.b16 %v301
        %v640 = vunpack.c.l.b16 %v302
        %v641 = vunpack.c.l.b16 %v303
        %v642 = vunpack.c.l.b16 %v304
        %v643 = vunpack.c.l.b16 %v305
        %v644 = vunpack.c.l.b16 %v306
        %v645 = vunpack.c.l.b16 %v307
        %v646 = vunpack.c.l.b16 %v308
        %v647 = vunpack.c.l.b16 %v309
        %v648 = vunpack.c.l.b16 %v310
        %v649 = vunpack.c.l.b16 %v311
        %v650 = vunpack.c.l.b16 %v312
        %v651 = vunpack.c.l.b16 %v313
        %v652 = vunpack.c.l.b16 %v314
        %v653 = vunpack.c.l.b16 %v315
        %v654 = vunpack.c.l.b16 %v316
        %v655 = vunpack.c.l.b16 %v317
        %v656 = vunpack.c.l.b16 %v318
        %v657 = vunpack.c.l.b16 %v319
        %v658 = vunpack.c.l.b16 %v320
        %v659 = vunpack.c.l.b16 %v321
        %v660 = vunpack.c.l.b16 %v322
        %v661 = vunpack.c.l.b16 %v323
        %v662 = vunpack.c.l.b16 %v324
        %v663 = vunpack.c.l.b16 %v325
        %v664 = vunpack.c.l.b16 %v326
        %v665 = vunpack.c.l.b16 %v327
        %v666 = vunpack.c.l.b16 %v328
        %v667 = vunpack.c.l.b16 %v329
        %v668 = vunpack.c.l.b16 %v330
        %v669 = vunpack.c.l.b16 %v331
        %v670 = vunpack.c.l.b16 %v332
        %v671 = vunpack.c.l.b16 %v333
        %v672 = vunpack.c.l.b16 %v334
        %v673 = vunpack.c.l.b16 %v335
        %v674 = vunpack.c.l.b16 %v336
        %v675 = vunpack.c.l.b16 %v337
        %v676 = vunpack.c.l.b16 %v338
        %v677 = vunpack.c.l.b16 %v339
        %v678 = vunpack.c.l.b16 %v340
        %v679 = vunpack.c.l.b16 %v341
        %v680 = vunpack.c.l.b16 %v342
        %v681 = vunpack.c.l.b16 %v343
        %v682 = vunpack.c.l.b16 %v344
        %v683 = vunpack.c.l.b16 %v345
        %v684 = vunpack.c.l.b16 %v346
        %v685 = vunpack.c.l.b16 %v347
        %v686 = vunpack.c.l.b16 %v348
        %v687 = vunpack.c.l.b16 %v349
        %v688 = vunpack.c.l.b16 %v350
        %v689 = vunpack.c.l.b16 %v351
        %v690 = vunpack.c.l.b16 %v352
        %v691 = vunpack.c.l.b16 %v353
        %v692 = vunpack.c.l.b16 %v354
        %v693 = vunpack.c.l.b16 %v355
        %v694 = vunpack.c.l.b16 %v356
        %v695 = vunpack.c.l.b16 %v357
        %v696 = vunpack.c.l.b16 %v358
        %v697 = vunpack.c.l.b16 %v359
        %v698 = vunpack.c.l.b16 %v360
        %v699 = vunpack.c.l.b16 %v361
        %v700 = vunpack.c.l.b16 %v362
        %v701 = vunpack.c.l.b16 %v363
        %v702 = vunpack.c.l.b16 %v364
        %v703 = vunpack.c.l.b16 %v365
        %v704 = vunpack.c.l.b16 %v366
        %v705 = vunpack.c.l.b16 %v367
        %v706 = vunpack.c.l.b16 %v368
        %v707 = vunpack.c.l.b16 %v369
        %v708 = vunpack.c.l.b16 %v370
        %v709 = vunpack.c.l.b16 %v371
        %v710 = vunpack.c.l.b16 %v372
        %v711 = vunpack.c.l.b16 %v373
        %v712 = vunpack.c.l.b16 %v374
        %v713 = vunpack.c.l.b16 %v375
        %v714 = vunpack.c.l.b16 %v376
        %v715 = vunpack.c.l.b16 %v377
        %v716 = vunpack.c.l.b16 %v378
        %v717 = vunpack.c.l.b16 %v379
        %v718 = vunpack.c.l.b16 %v380
        %v719 = vunpack.c.l.b16 %v381
        %v720 = vunpack.c.l.b16 %v382
        %v721 = vunpack.c.l.b16 %v383
        %v722 = vunpack.c.l.b16 %v384
        %v723 = vunpack.c.l.b16 %v385
        %v724 = vunpack.c.l.b16 %v386
        %v725 = vunpack.c.l.b16 %v387
        %v726 = vunpack.c.l.b16 %v388
        %v727 = vunpack.c.l.b16 %v389
        %v728 = vunpack.c.l.b16 %v390
        %v729 = vunpack.c.l.b16 %v391
        %v730 = vunpack.c.l.b16 %v392
        %v731 = vunpack.c.l.b16 %v393
        %v732 = vunpack.c.l.b16 %v394
        %v733 = vunpack.c.l.b16 %v395
        %v734 = vunpack.c.l.b16 %v396
        %v735 = vunpack.c.l.b16 %v397
        %v736 = vunpack.c.l.b16 %v398
        %v737 = vunpack.c.l.b16 %v399
        %v738 = vunpack.c.l.b16 %v400
        %v739 = vunpack.c.l.b16 %v401
        %v740 = vunpack.c.l.b16 %v402
        %v741 = vunpack.c.l.b16 %v403
        %v742 = vunpack.c.l.b16 %v404
        %v743 = vunpack.c.l.b16 %v405
        %v744 = vunpack.c.l.b16 %v406
        %v745 = vunpack.c.l.b16 %v407
        %v746 = vunpack.c.l.b16 %v408
        %v747 = vunpack.c.l.b16 %v409
        %v748 = vunpack.c.l.b16 %v410
        %v749 = vunpack.c.l.b16 %v411
        %v750 = vunpack.c.l.b16 %v412
        %v751 = vunpack.c.l.b16 %v413
        %v752 = vunpack.c.l.b16 %v414
        %v753 = vunpack.c.l.b16 %v415
        %v754 = vunpack.c.l.b16 %v416
        %v755 = vpack.c.b16 %v612, %v611
        %v756 = vpack.c.b16 %v614, %v613
        %v757 = vpack.c.b16 %v616, %v615
        %v758 = vpack.c.b16 %v618, %v617
        %v759 = vpack.c.b16 %v620, %v619
        %v760 = vpack.c.b16 %v622, %v621
        %v761 = vpack.c.b16 %v624, %v623
        %v762 = vpack.c.b16 %v626, %v625
        %v763 = vpack.c.b16 %v628, %v627
        %v764 = vpack.c.b16 %v630, %v629
        %v765 = vpack.c.b16 %v632, %v631
        %v766 = vpack.c.b16 %v634, %v633
        %v767 = vpack.c.b16 %v636, %v635
        %v768 = vpack.c.b16 %v638, %v637
        %v769 = vpack.c.b16 %v640, %v639
        %v770 = vpack.c.b16 %v642, %v641
        %v771 = vpack.c.b16 %v644, %v643
        %v772 = vpack.c.b16 %v646, %v645
        %v773 = vpack.c.b16 %v648, %v647
        %v774 = vpack.c.b16 %v650, %v649
        %v775 = vpack.c.b16 %v652, %v651
        %v776 = vpack.c.b16 %v654, %v653
        %v777 = vpack.c.b16 %v656, %v655
        %v778 = vpack.c.b16 %v658, %v657
        %v779 = vpack.c.b16 %v660, %v659
        %v780 = vpack.c.b16 %v662, %v661
        %v781 = vpack.c.b16 %v664, %v663
        %v782 = vpack.c.b16 %v666, %v665
        %v783 = vpack.c.b16 %v668, %v667
        %v784 = vpack.c.b16 %v670, %v669
        %v785 = vpack.c.b16 %v672, %v671
        %v786 = vpack.c.b16 %v674, %v673
        %v787 = vpack.c.b16 %v676, %v675
        %v788 = vpack.c.b16 %v678, %v677
        %v789 = vpack.c.b16 %v680, %v679
        %v790 = vpack.c.b16 %v682, %v681
        %v791 = vpack.c.b16 %v684, %v683
        %v792 = vpack.c.b16 %v686, %v685
        %v793 = vpack.c.b16 %v688, %v687
        %v794 = vpack.c.b16 %v690, %v689
        %v795 = vpack.c.b16 %v692, %v691
        %v796 = vpack.c.b16 %v694, %v693
        %v797 = vpack.c.b16 %v696, %v695
        %v798 = vpack.c.b16 %v698, %v697
        %v799 = vpack.c.b16 %v700, %v699
        %v800 = vpack.c.b16 %v702, %v701
        %v801 = vpack.c.b16 %v704, %v703
        %v802 = vpack.c.b16 %v706, %v705
        %v803 = vpack.c.b16 %v708, %v707
        %v804 = vpack.c.b16 %v710, %v709
        %v805 = vpack.c.b16 %v712, %v711
        %v806 = vpack.c.b16 %v714, %v713
        %v807 = vpack.c.b16 %v716, %v715
        %v808 = vpack.c.b16 %v718, %v717
        %v809 = vpack.c.b16 %v720, %v719
        %v810 = vpack.c.b16 %v722, %v721
        %v811 = vpack.c.b16 %v724, %v723
        %v812 = vpack.c.b16 %v726, %v725
        %v813 = vpack.c.b16 %v728, %v727
        %v814 = vpack.c.b16 %v730, %v729
        %v815 = vpack.c.b16 %v732, %v731
        %v816 = vpack.c.b16 %v734, %v733
        %v817 = vpack.c.b16 %v736, %v735
        %v818 = vpack.c.b16 %v738, %v737
        %v819 = vpack.c.b16 %v740, %v739
        %v820 = vpack.c.b16 %v742, %v741
        %v821 = vpack.c.b16 %v744, %v743
        %v822 = vpack.c.b16 %v746, %v745
        %v823 = vpack.c.b16 %v748, %v747
        %v824 = vpack.c.b16 %v750, %v749
        %v825 = vpack.c.b16 %v752, %v751
        %v826 = vpack.c.b16 %v754, %v753
        %899 = vmatprep.subr.bf16.mxu0 0
        %900 = vmatpush1.bf16.msra.mxu0 %v762
        %901 = vmatprep.subr.bf16.mxu0 0
        %902 = vmatpush1.bf16.msra.mxu0 %v761
        %903 = vmatprep.subr.bf16.mxu0 0
        %904 = vmatpush1.bf16.msra.mxu0 %v760
        %905 = vmatprep.subr.bf16.mxu0 0
        %906 = vmatpush1.bf16.msra.mxu0 %v759
        %907 = vmatprep.subr.bf16.mxu0 0
        %908 = vmatpush1.bf16.msra.mxu0 %v758
        %909 = vmatprep.subr.bf16.mxu0 0
        %910 = vmatpush1.bf16.msra.mxu0 %v757
        %911 = vmatprep.subr.bf16.mxu0 0
        %912 = vmatpush1.bf16.msra.mxu0 %v756
        %913 = vmatprep.subr.bf16.mxu0 0
        %914 = vmatpush1.bf16.msra.mxu0 %v755
        %915 = vmatprep.subr.bf16.mxu0 0
        %916 = vmatpush2.bf16.msra.mxu0 %v770
        %917 = vmatprep.subr.bf16.mxu0 0
        %918 = vmatpush2.bf16.msra.mxu0 %v769
        %919 = vmatprep.subr.bf16.mxu0 0
        %920 = vmatpush2.bf16.msra.mxu0 %v768
        %921 = vmatprep.subr.bf16.mxu0 0
        %922 = vmatpush2.bf16.msra.mxu0 %v767
        %923 = vmatprep.subr.bf16.mxu0 0
        %924 = vmatpush2.bf16.msra.mxu0 %v766
        %925 = vmatprep.subr.bf16.mxu0 0
        %926 = vmatpush2.bf16.msra.mxu0 %v765
        %927 = vmatprep.subr.bf16.mxu0 0
        %928 = vmatpush2.bf16.msra.mxu0 %v764
        %929 = vmatprep.subr.bf16.mxu0 0
        %930 = vmatpush2.bf16.msra.mxu0 %v763
        %931 = vmatprep.mubr.bf16.mxu0 %v440
        %932 = vmatmul.mubr.bf16.gmra.mxu0 %v437
        %v933 = vpop.f32.mrf.mxu0
        %v934 = vadd.f32 %v465, %v933
        %v935 = vpop.f32.mrf.mxu0
        %v936 = vpop.f32.mrf.mxu0
        %v937 = vadd.f32 %v465, %v936
        %v938 = vpop.f32.mrf.mxu0
        %939 = vdwg.mxu0
        %940 = vmatprep.subr.bf16.mxu0 0
        %941 = vmatpush1.bf16.msra.mxu0 %v778
        %942 = vmatprep.subr.bf16.mxu0 0
        %943 = vmatpush1.bf16.msra.mxu0 %v777
        %944 = vmatprep.subr.bf16.mxu0 0
        %945 = vmatpush1.bf16.msra.mxu0 %v776
        %946 = vmatprep.subr.bf16.mxu0 0
        %947 = vmatpush1.bf16.msra.mxu0 %v775
        %948 = vmatprep.subr.bf16.mxu0 0
        %949 = vmatpush1.bf16.msra.mxu0 %v774
        %950 = vmatprep.subr.bf16.mxu0 0
        %951 = vmatpush1.bf16.msra.mxu0 %v773
        %952 = vmatprep.subr.bf16.mxu0 0
        %953 = vmatpush1.bf16.msra.mxu0 %v772
        %954 = vmatprep.subr.bf16.mxu0 0
        %955 = vmatpush1.bf16.msra.mxu0 %v771
        %956 = vmatprep.subr.bf16.mxu0 0
        %957 = vmatpush2.bf16.msra.mxu0 %v786
        %958 = vmatprep.subr.bf16.mxu0 0
        %959 = vmatpush2.bf16.msra.mxu0 %v785
        %960 = vmatprep.subr.bf16.mxu0 0
        %961 = vmatpush2.bf16.msra.mxu0 %v784
        %962 = vmatprep.subr.bf16.mxu0 0
        %963 = vmatpush2.bf16.msra.mxu0 %v783
        %964 = vmatprep.subr.bf16.mxu0 0
        %965 = vmatpush2.bf16.msra.mxu0 %v782
        %966 = vmatprep.subr.bf16.mxu0 0
        %967 = vmatpush2.bf16.msra.mxu0 %v781
        %968 = vmatprep.subr.bf16.mxu0 0
        %969 = vmatpush2.bf16.msra.mxu0 %v780
        %970 = vmatprep.subr.bf16.mxu0 0
        %971 = vmatpush2.bf16.msra.mxu0 %v779
        %972 = vmatprep.mubr.bf16.mxu0 %v446
        %973 = vmatmul.mubr.bf16.gmra.mxu0 %v443
        %v974 = vpop.f32.mrf.mxu0
        %v975 = vadd.f32 %v934, %v974
        %v976 = vpop.f32.mrf.mxu0
        %v977 = vpop.f32.mrf.mxu0
        %v978 = vadd.f32 %v937, %v977
        %v979 = vpop.f32.mrf.mxu0
        %980 = vdwg.mxu0
        %981 = vmatprep.subr.bf16.mxu0 0
        %982 = vmatpush1.bf16.msra.mxu0 %v794
        %983 = vmatprep.subr.bf16.mxu0 0
        %984 = vmatpush1.bf16.msra.mxu0 %v793
        %985 = vmatprep.subr.bf16.mxu0 0
        %986 = vmatpush1.bf16.msra.mxu0 %v792
        %987 = vmatprep.subr.bf16.mxu0 0
        %988 = vmatpush1.bf16.msra.mxu0 %v791
        %989 = vmatprep.subr.bf16.mxu0 0
        %990 = vmatpush1.bf16.msra.mxu0 %v790
        %991 = vmatprep.subr.bf16.mxu0 0
        %992 = vmatpush1.bf16.msra.mxu0 %v789
        %993 = vmatprep.subr.bf16.mxu0 0
        %994 = vmatpush1.bf16.msra.mxu0 %v788
        %995 = vmatprep.subr.bf16.mxu0 0
        %996 = vmatpush1.bf16.msra.mxu0 %v787
        %997 = vmatprep.subr.bf16.mxu0 0
        %998 = vmatpush2.bf16.msra.mxu0 %v802
        %999 = vmatprep.subr.bf16.mxu0 0
        %1000 = vmatpush2.bf16.msra.mxu0 %v801
        %1001 = vmatprep.subr.bf16.mxu0 0
        %1002 = vmatpush2.bf16.msra.mxu0 %v800
        %1003 = vmatprep.subr.bf16.mxu0 0
        %1004 = vmatpush2.bf16.msra.mxu0 %v799
        %1005 = vmatprep.subr.bf16.mxu0 0
        %1006 = vmatpush2.bf16.msra.mxu0 %v798
        %1007 = vmatprep.subr.bf16.mxu0 0
        %1008 = vmatpush2.bf16.msra.mxu0 %v797
        %1009 = vmatprep.subr.bf16.mxu0 0
        %1010 = vmatpush2.bf16.msra.mxu0 %v796
        %1011 = vmatprep.subr.bf16.mxu0 0
        %1012 = vmatpush2.bf16.msra.mxu0 %v795
        %1013 = vmatprep.mubr.bf16.mxu0 %v452
        %1014 = vmatmul.mubr.bf16.gmra.mxu0 %v449
        %v1015 = vpop.f32.mrf.mxu0
        %v1016 = vadd.f32 %v975, %v1015
        %v1017 = vpop.f32.mrf.mxu0
        %v1018 = vpop.f32.mrf.mxu0
        %v1019 = vadd.f32 %v978, %v1018
        %v1020 = vpop.f32.mrf.mxu0
        %1021 = vdwg.mxu0
        %1022 = vmatprep.subr.bf16.mxu0 0
        %1023 = vmatpush1.bf16.msra.mxu0 %v810
        %1024 = vmatprep.subr.bf16.mxu0 0
        %1025 = vmatpush1.bf16.msra.mxu0 %v809
        %1026 = vmatprep.subr.bf16.mxu0 0
        %1027 = vmatpush1.bf16.msra.mxu0 %v808
        %1028 = vmatprep.subr.bf16.mxu0 0
        %1029 = vmatpush1.bf16.msra.mxu0 %v807
        %1030 = vmatprep.subr.bf16.mxu0 0
        %1031 = vmatpush1.bf16.msra.mxu0 %v806
        %1032 = vmatprep.subr.bf16.mxu0 0
        %1033 = vmatpush1.bf16.msra.mxu0 %v805
        %1034 = vmatprep.subr.bf16.mxu0 0
        %1035 = vmatpush1.bf16.msra.mxu0 %v804
        %1036 = vmatprep.subr.bf16.mxu0 0
        %1037 = vmatpush1.bf16.msra.mxu0 %v803
        %1038 = vmatprep.subr.bf16.mxu0 0
        %1039 = vmatpush2.bf16.msra.mxu0 %v818
        %1040 = vmatprep.subr.bf16.mxu0 0
        %1041 = vmatpush2.bf16.msra.mxu0 %v817
        %1042 = vmatprep.subr.bf16.mxu0 0
        %1043 = vmatpush2.bf16.msra.mxu0 %v816
        %1044 = vmatprep.subr.bf16.mxu0 0
        %1045 = vmatpush2.bf16.msra.mxu0 %v815
        %1046 = vmatprep.subr.bf16.mxu0 0
        %1047 = vmatpush2.bf16.msra.mxu0 %v814
        %1048 = vmatprep.subr.bf16.mxu0 0
        %1049 = vmatpush2.bf16.msra.mxu0 %v813
        %1050 = vmatprep.subr.bf16.mxu0 0
        %1051 = vmatpush2.bf16.msra.mxu0 %v812
        %1052 = vmatprep.subr.bf16.mxu0 0
        %1053 = vmatpush2.bf16.msra.mxu0 %v811
        %1054 = vmatprep.mubr.bf16.mxu0 %v458
        %1055 = vmatmul.mubr.bf16.gmra.mxu0 %v455
        %v1056 = vpop.f32.mrf.mxu0
        %v1057 = vadd.f32 %v1016, %v1056
        %v1058 = vpop.f32.mrf.mxu0
        %v1059 = vpop.f32.mrf.mxu0
        %v1060 = vadd.f32 %v1019, %v1059
        %v1061 = vpop.f32.mrf.mxu0
        %1062 = vdwg.mxu0
        %1063 = vmatprep.subr.bf16.mxu0 0
        %1064 = vmatpush1.bf16.msra.mxu0 %v826
        %1065 = vmatprep.subr.bf16.mxu0 0
        %1066 = vmatpush1.bf16.msra.mxu0 %v825
        %1067 = vmatprep.subr.bf16.mxu0 0
        %1068 = vmatpush1.bf16.msra.mxu0 %v824
        %1069 = vmatprep.subr.bf16.mxu0 0
        %1070 = vmatpush1.bf16.msra.mxu0 %v823
        %1071 = vmatprep.subr.bf16.mxu0 0
        %1072 = vmatpush1.bf16.msra.mxu0 %v822
        %1073 = vmatprep.subr.bf16.mxu0 0
        %1074 = vmatpush1.bf16.msra.mxu0 %v821
        %1075 = vmatprep.subr.bf16.mxu0 0
        %1076 = vmatpush1.bf16.msra.mxu0 %v820
        %1077 = vmatprep.subr.bf16.mxu0 0
        %1078 = vmatpush1.bf16.msra.mxu0 %v819
        %1079 = vmatprep.subr.bf16.mxu0 0
        %1080 = vmatpush2.bf16.msra.mxu0 0
        %1081 = vmatprep.subr.bf16.mxu0 0
        %1082 = vmatpush2.bf16.msra.mxu0 0
        %1083 = vmatprep.subr.bf16.mxu0 0
        %1084 = vmatpush2.bf16.msra.mxu0 0
        %1085 = vmatprep.subr.bf16.mxu0 0
        %1086 = vmatpush2.bf16.msra.mxu0 0
        %1087 = vmatprep.subr.bf16.mxu0 0
        %1088 = vmatpush2.bf16.msra.mxu0 0
        %1089 = vmatprep.subr.bf16.mxu0 0
        %1090 = vmatpush2.bf16.msra.mxu0 0
        %1091 = vmatprep.subr.bf16.mxu0 0
        %1092 = vmatpush2.bf16.msra.mxu0 0
        %1093 = vmatprep.subr.bf16.mxu0 0
        %1094 = vmatpush2.bf16.msra.mxu0 0
        %1095 = vmatprep.mubr.bf16.mxu0 0
        %1096 = vmatmul.mubr.bf16.gmra.mxu0 %v460
        %v1097 = vpop.f32.mrf.mxu0
        %v1098 = vadd.f32 %v1057, %v1097
        %v1099 = vpop.f32.mrf.mxu0
        %v1100 = vpop.f32.mrf.mxu0
        %v1101 = vadd.f32 %v1060, %v1100
        %v1102 = vpop.f32.mrf.mxu0
        %1103 = vdwg.mxu0
        %v1104 = vmin.f32 %v1098, 20.0
        %v1105 = vmin.f32 %v1101, 20.0
        %v1106 = vmul.f32 %v1104, 1.442695
        %v1107 = vpow.pop %v1106
        %v1108 = vmul.f32 %v1105, 1.442695
        %v1109 = vpow.pop %v1108
        %v1110 = vadd.f32 %v1107, 2.0
        %v1111 = vadd.f32 %v1109, 2.0
        %v1112 = vmul.f32 %v1107, %v1110
        %v1113 = vmul.f32 %v1109, %v1111
        %v1114 = vadd.f32 %v1112, 2.0
        %v1115 = vadd.f32 %v1113, 2.0
        %v1116 = vrcp.pop %v1114
        %v1117 = vrcp.pop %v1115
        %v1118 = vmul.f32 %v1112, %v1116
        %v1119 = vmul.f32 %v1113, %v1117
        %v1120 = vmul.f32 %v1098, %v1118
        %v1121 = vmul.f32 %v1101, %v1119
        %v1122 = vpack.c.bf16 %v1121, %v1120
        %v1124 = vlaneseq
        %v1125 = vshrl.u32 %v1124, 7
        %v1126 = vsub.s32 0, %v1125
        %v1127 = vrot.slane %v434, %v1126
        %v1145 = vunpack.c.l.b16 %v417
        %v1146 = vunpack.c.l.b16 %v418
        %v1147 = vunpack.c.l.b16 %v419
        %v1148 = vunpack.c.l.b16 %v420
        %v1149 = vunpack.c.l.b16 %v421
        %v1150 = vunpack.c.l.b16 %v422
        %v1151 = vunpack.c.l.b16 %v423
        %v1152 = vunpack.c.l.b16 %v424
        %v1153 = vunpack.c.l.b16 %v425
        %v1154 = vunpack.c.l.b16 %v426
        %v1155 = vunpack.c.l.b16 %v427
        %v1156 = vunpack.c.l.b16 %v428
        %v1157 = vunpack.c.l.b16 %v429
        %v1158 = vunpack.c.l.b16 %v430
        %v1159 = vunpack.c.l.b16 %v431
        %v1160 = vunpack.c.l.b16 %v432
        %v1161 = vpack.c.b16 %v1146, %v1145
        %v1162 = vpack.c.b16 %v1148, %v1147
        %v1163 = vpack.c.b16 %v1150, %v1149
        %v1164 = vpack.c.b16 %v1152, %v1151
        %v1165 = vpack.c.b16 %v1154, %v1153
        %v1166 = vpack.c.b16 %v1156, %v1155
        %v1167 = vpack.c.b16 %v1158, %v1157
        %v1168 = vpack.c.b16 %v1160, %v1159
        %1177 = vmatprep.subr.bf16.mxu0 0
        %1178 = vmatpush1.bf16.msra.mxu0 %v1168
        %1179 = vmatprep.subr.bf16.mxu0 0
        %1180 = vmatpush1.bf16.msra.mxu0 %v1167
        %1181 = vmatprep.subr.bf16.mxu0 0
        %1182 = vmatpush1.bf16.msra.mxu0 %v1166
        %1183 = vmatprep.subr.bf16.mxu0 0
        %1184 = vmatpush1.bf16.msra.mxu0 %v1165
        %1185 = vmatprep.subr.bf16.mxu0 0
        %1186 = vmatpush1.bf16.msra.mxu0 %v1164
        %1187 = vmatprep.subr.bf16.mxu0 0
        %1188 = vmatpush1.bf16.msra.mxu0 %v1163
        %1189 = vmatprep.subr.bf16.mxu0 0
        %1190 = vmatpush1.bf16.msra.mxu0 %v1162
        %1191 = vmatprep.subr.bf16.mxu0 0
        %1192 = vmatpush1.bf16.msra.mxu0 %v1161
        %1193 = vmatprep.subr.bf16.mxu0 0
        %1194 = vmatpush2.bf16.msra.mxu0 0
        %1195 = vmatprep.subr.bf16.mxu0 0
        %1196 = vmatpush2.bf16.msra.mxu0 0
        %1197 = vmatprep.subr.bf16.mxu0 0
        %1198 = vmatpush2.bf16.msra.mxu0 0
        %1199 = vmatprep.subr.bf16.mxu0 0
        %1200 = vmatpush2.bf16.msra.mxu0 0
        %1201 = vmatprep.subr.bf16.mxu0 0
        %1202 = vmatpush2.bf16.msra.mxu0 0
        %1203 = vmatprep.subr.bf16.mxu0 0
        %1204 = vmatpush2.bf16.msra.mxu0 0
        %1205 = vmatprep.subr.bf16.mxu0 0
        %1206 = vmatpush2.bf16.msra.mxu0 0
        %1207 = vmatprep.subr.bf16.mxu0 0
        %1208 = vmatpush2.bf16.msra.mxu0 0
        %1209 = vmatprep.mubr.bf16.mxu0 0
        %1210 = vmatmul.mubr.bf16.gmra.mxu0 %v1122
        %v1211 = vpop.f32.mrf.mxu0
        %v1212 = vadd.f32 %v1127, %v1211
        %v1213 = vpop.f32.mrf.mxu0
        %v1214 = vpop.f32.mrf.mxu0
        %v1215 = vadd.f32 %v1127, %v1214
        %v1216 = vpop.f32.mrf.mxu0
        %1217 = vdwg.mxu0
        %v1218 = vadd.f32 %v1212, %v447
        %v1219 = vadd.f32 %v1215, %v448
        %1220 = vst [vmem:[%s271] sm:$0xff] %v1218
        %1221 = vst [vmem:[%s271 + $0x8] sm:$0xff] %v1219
        %s1222 = sand.u32 %s141, 1
        %s1223 = scalar_lea.sflag [#allocation4], %s1222
        %s1224 = sand.u32 %s141, 1
        %s1225 = smul.addr %s1224, 16
        %s1226 = scalar_lea.vmem [#allocation8], %s1225
        // Predicated region
        $region53: #{tpu_custom_call.1} parent=39 // pred_check
          %p1227 = pneg %p151
        $region54: #{tpu_custom_call.1} parent=39 // pred_check_branch
          %1229 = sbr.rel (%p1227) target = $region56
        $region55: #{tpu_custom_call.1} parent=39 // pred_region
          %s1231 = ssub.s32 256, 256
          %1232 = vsyncadd %s1223, %s1231
          %s1233 = smul.addr %s23, 2
          %s1234 = smul.addr %s1233, 128
          %s1235 = scalar_lea.hbm %s5, %s1234
          %s1236 = sshll.u32 %s1226, 4
          %s1237 = int_to_ptr.vmem [resolvable:$true] %s1236
          %1242 = dma.vmem_to_hbm [thread:$0]  %s1237, 256, %s1235, %s1223, 128, 128, 8
        $region56: #{tpu_custom_call.1} parent=39 // pred_fallthru
          _
      $region40: #{tpu_custom_call.1} parent=5 // pred_fallthru
        _
      %p1243 = scmp.le.s32.totalorder 2, %s18
      // Predicated region
      $region57: #{tpu_custom_call.1} parent=5 // pred_check
        %p1244 = pneg %p1243
      $region58: #{tpu_custom_call.1} parent=5 // pred_check_branch
        %1246 = sbr.rel (%p1244) target = $region60
      $region59: #{tpu_custom_call.1} parent=5 // pred_region
        %s1247 = ssub.s32 %s18, 2
        // Predicated region
        $region61: #{tpu_custom_call.1} parent=59 // pred_check
          %p1248 = pneg %p157
        $region62: #{tpu_custom_call.1} parent=59 // pred_check_branch
          %1250 = sbr.rel (%p1248) target = $region64
        $region63: #{tpu_custom_call.1} parent=59 // pred_region
          %s1251 = sand.u32 %s142, 1
          %s1252 = scalar_lea.sflag [#allocation4], %s1251
          %s1253 = sand.u32 %s142, 1
          %s1254 = smul.addr %s1253, 16
          %s1255 = scalar_lea.vmem [#allocation8], %s1254
          %1256 = dma.done %s1252, 256
        $region64: #{tpu_custom_call.1} parent=59 // pred_fallthru
          _
      $region60: #{tpu_custom_call.1} parent=5 // pred_fallthru
        _
    $region6: #{tpu_custom_call.1} parent=1 // loop_footer
      %s22 = sadd.s32 1, %s18
    $region7: #{tpu_custom_call.1} parent=1 // loop_footer_branch
      %17 = sbr.rel target = $region3
    $region8: #{tpu_custom_call.1} parent=1 // loop_exit
      _
    %1257 = vsyncpa [#allocation3], 1
    %s1258 = scalar_lea.sflag [#allocation3], 1
    %1259 = vsyncpa %s1258, 1
    %1260 = vsyncpa [#allocation6], 1
    %1261 = vsyncpa [#allocation4], 1
    %s1262 = scalar_lea.sflag [#allocation4], 1
    %1263 = vsyncpa %s1262, 1

// kernel: tpu_custom_call.1
$region0: #{tpu_custom_call.1}
  #allocation0 [shape = 'u32[]', space=smem, size = 0x4, offset = 0x4, fixed_abs, tag = 'smem constant byte address 0x4 - core index']
  #allocation1 [shape = 'u32[144,128]{1,0:T(1,128)}', space=vmem, size = 0x12000, scoped, tag = 'internal scratch']
  %s0 = inlined_call_operand.hbm [shape: f32[2,32,128], index: 0, kind: input, shape index: {}]
  %s1 = inlined_call_operand.hbm [shape: bf16[1152,128], index: 1, kind: input, shape index: {}]
  %s2 = inlined_call_operand.vmem [shape: f32[1,128], index: 2, kind: input, shape index: {}]
  %s3 = inlined_call_operand.hbm [shape: bf16[128,128], index: 3, kind: input, shape index: {}]
  %s4 = inlined_call_operand.vmem [shape: f32[1,128], index: 4, kind: input, shape index: {}]
  %s5 = inlined_call_operand.hbm [shape: f32[2,16,128], index: 5, kind: output, shape index: {}]
  %s6 = sld [smem:[#allocation0]]
  $region65: #{tpu_custom_call.1} parent=0
    _
  %s8 = ssub.s32 1, %s6
  %s9 = scalar_select 0, %s8, %s6
  $region1: #{tpu_custom_call.1} parent=0
    #allocation2 [shape = 'u8[32768]{0}', space=vmem, size = 0x8000, scoped, tag = 'input window, operand 0']
    #allocation3 [shape = 's32[2]{0}', space=sflag, size = 0x8, scoped, tag = 'scoped memory for tpu_custom_call.1']
    #allocation4 [shape = 's32[2]{0}', space=sflag, size = 0x8, scoped, tag = 'scoped memory for tpu_custom_call.1']
    #allocation5 [shape = 'u8[294912]{0}', space=vmem, size = 0x48000, scoped, tag = 'input window, operand 1, single buffered']
    #allocation6 [shape = 's32[1]{0}', space=sflag, size = 0x4, scoped, tag = 'scoped memory for tpu_custom_call.1']
    #allocation7 [shape = 'u8[32768]{0}', space=vmem, size = 0x8000, scoped, tag = 'input window, operand 3, single buffered']
    #allocation8 [shape = 'u8[16384]{0}', space=vmem, size = 0x4000, scoped, tag = 'output window, operand 0']
    %10 = vsyncpa [#allocation3], 0
    %s11 = scalar_lea.sflag [#allocation3], 1
    %12 = vsyncpa %s11, 0
    %13 = vsyncpa [#allocation6], 0
    %14 = vsyncpa [#allocation4], 0
    %s15 = scalar_lea.sflag [#allocation4], 1
    %16 = vsyncpa %s15, 0
    loop: start=0, step=1, limit=4
    $region2: #{tpu_custom_call.1} parent=1 // loop_pre_header
      _
    $region3: #{tpu_custom_call.1} parent=1 // loop_header
      %s18 = sphi 0, %s22
      %p19 = scmp.ge.s32.totalorder %s18, 4
      %s28 = sphi 0, %s30
      %s31 = sphi 0, %s28
      %s32 = sphi 0, %s31
      %s48 = sphi 0, %s32
      %s52 = sphi 0, %s52
      %s54 = sphi 0, %s52
      %s55 = sphi 0, %s54
      %s69 = sphi 0, %s55
      %s73 = sphi 0, %s73
      %s75 = sphi 0, %s73
      %s76 = sphi 0, %s75
      %s90 = sphi 0, %s76
      %s94 = sphi 0, %s94
      %s96 = sphi 0, %s94
      %s97 = sphi 0, %s96
      %s111 = sphi 0, %s97
      %s115 = sphi 0, %s115
      %s117 = sphi 0, %s115
      %s118 = sphi 0, %s117
      %s132 = sphi 0, %s118
      %s138 = sphi 0, %s140
      %s141 = sphi 0, %s138
      %s142 = sphi 0, %s141
      %s158 = sphi 0, %s142
    $region4: #{tpu_custom_call.1} parent=1 // loop_header_branch
      %21 = sbr.rel (%p19) target = $region8
    $region5: #{tpu_custom_call.1} parent=1 // loop_body
      %s23 = ssub.s32 %s18, 1
      %s24 = ssub.s32 %s18, 2
      %s25 = sadd.s32 %s18, 1
      %s26 = ssub.s32 %s18, %s25
      %p27 = scmp.eq.s32.totalorder %s26, 0
      %s29 = sadd.s32 %s28, 1
      %s30 = scalar_select %p27, %s28, %s29
      %p33 = pneg %p27
      %p34 = scmp.eq.s32.totalorder %s18, 1
      %p35 = por %p33, %p34
      %p36 = scmp.ne.s32.totalorder %s28, %s31
      %p37 = scmp.eq.s32.totalorder %s18, 0
      %p38 = por %p36, %p37
      %p39 = scmp.ne.s32.totalorder %s28, %s31
      %p40 = scmp.eq.s32.totalorder %s23, 1
      %p41 = por %p39, %p40
      %p42 = scmp.ne.s32.totalorder %s31, %s32
      %p43 = scmp.eq.s32.totalorder %s23, 0
      %p44 = por %p42, %p43
      %p45 = scmp.ne.s32.totalorder %s31, %s32
      %p46 = scmp.eq.s32.totalorder %s24, 1
      %p47 = por %p45, %p46
      %p49 = scmp.ne.s32.totalorder %s32, %s48
      %p50 = scmp.eq.s32.totalorder %s24, 0
      %p51 = por %p49, %p50
      %s53 = sadd.s32 %s52, 1
      %p56 = scmp.eq.s32.totalorder %s18, 1
      %p57 = scmp.ne.s32.totalorder %s52, %s54
      %p58 = scmp.eq.s32.totalorder %s18, 0
      %p59 = por %p57, %p58
      %p60 = scmp.ne.s32.totalorder %s52, %s54
      %p61 = scmp.eq.s32.totalorder %s23, 1
      %p62 = por %p60, %p61
      %p63 = scmp.ne.s32.totalorder %s54, %s55
      %p64 = scmp.eq.s32.totalorder %s23, 0
      %p65 = por %p63, %p64
      %p66 = scmp.ne.s32.totalorder %s54, %s55
      %p67 = scmp.eq.s32.totalorder %s24, 1
      %p68 = por %p66, %p67
      %p70 = scmp.ne.s32.totalorder %s55, %s69
      %p71 = scmp.eq.s32.totalorder %s24, 0
      %p72 = por %p70, %p71
      %s74 = sadd.s32 %s73, 1
      %p77 = scmp.eq.s32.totalorder %s18, 1
      %p78 = scmp.ne.s32.totalorder %s73, %s75
      %p79 = scmp.eq.s32.totalorder %s18, 0
      %p80 = por %p78, %p79
      %p81 = scmp.ne.s32.totalorder %s73, %s75
      %p82 = scmp.eq.s32.totalorder %s23, 1
      %p83 = por %p81, %p82
      %p84 = scmp.ne.s32.totalorder %s75, %s76
      %p85 = scmp.eq.s32.totalorder %s23, 0
      %p86 = por %p84, %p85
      %p87 = scmp.ne.s32.totalorder %s75, %s76
      %p88 = scmp.eq.s32.totalorder %s24, 1
      %p89 = por %p87, %p88
      %p91 = scmp.ne.s32.totalorder %s76, %s90
      %p92 = scmp.eq.s32.totalorder %s24, 0
      %p93 = por %p91, %p92
      %s95 = sadd.s32 %s94, 1
      %p98 = scmp.eq.s32.totalorder %s18, 1
      %p99 = scmp.ne.s32.totalorder %s94, %s96
      %p100 = scmp.eq.s32.totalorder %s18, 0
      %p101 = por %p99, %p100
      %p102 = scmp.ne.s32.totalorder %s94, %s96
      %p103 = scmp.eq.s32.totalorder %s23, 1
      %p104 = por %p102, %p103
      %p105 = scmp.ne.s32.totalorder %s96, %s97
      %p106 = scmp.eq.s32.totalorder %s23, 0
      %p107 = por %p105, %p106
      %p108 = scmp.ne.s32.totalorder %s96, %s97
      %p109 = scmp.eq.s32.totalorder %s24, 1
      %p110 = por %p108, %p109
      %p112 = scmp.ne.s32.totalorder %s97, %s111
      %p113 = scmp.eq.s32.totalorder %s24, 0
      %p114 = por %p112, %p113
      %s116 = sadd.s32 %s115, 1
      %p119 = scmp.eq.s32.totalorder %s18, 1
      %p120 = scmp.ne.s32.totalorder %s115, %s117
      %p121 = scmp.eq.s32.totalorder %s18, 0
      %p122 = por %p120, %p121
      %p123 = scmp.ne.s32.totalorder %s115, %s117
      %p124 = scmp.eq.s32.totalorder %s23, 1
      %p125 = por %p123, %p124
      %p126 = scmp.ne.s32.totalorder %s117, %s118
      %p127 = scmp.eq.s32.totalorder %s23, 0
      %p128 = por %p126, %p127
      %p129 = scmp.ne.s32.totalorder %s117, %s118
      %p130 = scmp.eq.s32.totalorder %s24, 1
      %p131 = por %p129, %p130
      %p133 = scmp.ne.s32.totalorder %s118, %s132
      %p134 = scmp.eq.s32.totalorder %s24, 0
      %p135 = por %p133, %p134
      %s136 = ssub.s32 %s18, %s25
      %p137 = scmp.eq.s32.totalorder %s136, 0
      %s139 = sadd.s32 %s138, 1
      %s140 = scalar_select %p137, %s138, %s139
      %p143 = pneg %p137
      %p144 = scmp.eq.s32.totalorder %s18, 1
      %p145 = por %p143, %p144
      %p146 = scmp.ne.s32.totalorder %s138, %s141
      %p147 = scmp.eq.s32.totalorder %s18, 0
      %p148 = por %p146, %p147
      %p149 = scmp.ne.s32.totalorder %s138, %s141
      %p150 = scmp.eq.s32.totalorder %s23, 1
      %p151 = por %p149, %p150
      %p152 = scmp.ne.s32.totalorder %s141, %s142
      %p153 = scmp.eq.s32.totalorder %s23, 0
      %p154 = por %p152, %p153
      %p155 = scmp.ne.s32.totalorder %s141, %s142
      %p156 = scmp.eq.s32.totalorder %s24, 1
      %p157 = por %p155, %p156
      %p159 = scmp.ne.s32.totalorder %s142, %s158
      %p160 = scmp.eq.s32.totalorder %s24, 0
      %p161 = por %p159, %p160
      %p162 = scmp.le.s32.totalorder 1, %s18
      %p163 = scmp.lt.s32.totalorder %s18, 3
      %p164 = pnand %p162, %p163
      %p165 = pneg %p164
      // Predicated region
      $region9: #{tpu_custom_call.1} parent=5 // pred_check
        _
      $region10: #{tpu_custom_call.1} parent=5 // pred_check_branch
        %167 = sbr.rel (%p164) target = $region12
      $region11: #{tpu_custom_call.1} parent=5 // pred_region
        %s168 = ssub.s32 %s18, 1
        // Predicated region
        $region13: #{tpu_custom_call.1} parent=11 // pred_check
          %p169 = pneg %p65
        $region14: #{tpu_custom_call.1} parent=11 // pred_check_branch
          %171 = sbr.rel (%p169) target = $region16
        $region15: #{tpu_custom_call.1} parent=11 // pred_region
          %s173 = ssub.s32 9216, 9216
          %174 = vsyncadd [#allocation6], %s173
          %s175 = sshll.u32 [#allocation5], 4
          %s176 = int_to_ptr.vmem [resolvable:$true] %s175
          %181 = dma.hbm_to_vmem [thread:$0]  %s1, 9216, %s176, [#allocation6], 64, 64, 4
        $region16: #{tpu_custom_call.1} parent=11 // pred_fallthru
          _
        // Predicated region
        $region17: #{tpu_custom_call.1} parent=11 // pred_check
          %p182 = pneg %p86
        $region18: #{tpu_custom_call.1} parent=11 // pred_check_branch
          %184 = sbr.rel (%p182) target = $region20
        $region19: #{tpu_custom_call.1} parent=11 // pred_region
          _
        $region20: #{tpu_custom_call.1} parent=11 // pred_fallthru
          _
        // Predicated region
        $region21: #{tpu_custom_call.1} parent=11 // pred_check
          %p185 = pneg %p107
        $region22: #{tpu_custom_call.1} parent=11 // pred_check_branch
          %187 = sbr.rel (%p185) target = $region24
        $region23: #{tpu_custom_call.1} parent=11 // pred_region
          %s189 = ssub.s32 1024, 1024
          %190 = vsyncadd [#allocation6], %s189
          %s191 = sshll.u32 [#allocation7], 4
          %s192 = int_to_ptr.vmem [resolvable:$true] %s191
          %197 = dma.hbm_to_vmem [thread:$0]  %s3, 1024, %s192, [#allocation6], 64, 64, 4
        $region24: #{tpu_custom_call.1} parent=11 // pred_fallthru
          _
        // Predicated region
        $region25: #{tpu_custom_call.1} parent=11 // pred_check
          %p198 = pneg %p128
        $region26: #{tpu_custom_call.1} parent=11 // pred_check_branch
          %200 = sbr.rel (%p198) target = $region28
        $region27: #{tpu_custom_call.1} parent=11 // pred_region
          _
        $region28: #{tpu_custom_call.1} parent=11 // pred_fallthru
          _
      $region12: #{tpu_custom_call.1} parent=5 // pred_fallthru
        _
      %p201 = scmp.lt.s32.totalorder %s18, 2
      // Predicated region
      $region29: #{tpu_custom_call.1} parent=5 // pred_check
        %p202 = pneg %p201
      $region30: #{tpu_custom_call.1} parent=5 // pred_check_branch
        %204 = sbr.rel (%p202) target = $region32
      $region31: #{tpu_custom_call.1} parent=5 // pred_region
        // Predicated region
        $region33: #{tpu_custom_call.1} parent=31 // pred_check
          %p205 = pneg %p38
        $region34: #{tpu_custom_call.1} parent=31 // pred_check_branch
          %207 = sbr.rel (%p205) target = $region36
        $region35: #{tpu_custom_call.1} parent=31 // pred_region
          %s208 = sand.u32 %s28, 1
          %s209 = scalar_lea.sflag [#allocation3], %s208
          %s210 = sand.u32 %s28, 1
          %s211 = smul.addr %s210, 32
          %s212 = scalar_lea.vmem [#allocation2], %s211
          %s214 = ssub.s32 512, 512
          %215 = vsyncadd %s209, %s214
          %s216 = smul.addr %s18, 4
          %s217 = smul.addr %s216, 128
          %s218 = scalar_lea.hbm %s0, %s217
          %s219 = sshll.u32 %s212, 4
          %s220 = int_to_ptr.vmem [resolvable:$true] %s219
          %225 = dma.hbm_to_vmem [thread:$0]  %s218, 512, %s220, %s209, 128, 128, 8
        $region36: #{tpu_custom_call.1} parent=31 // pred_fallthru
          _
      $region32: #{tpu_custom_call.1} parent=5 // pred_fallthru
        _
      %p226 = scmp.le.s32.totalorder 1, %s18
      %p227 = scmp.lt.s32.totalorder %s18, 3
      %p228 = pnand %p226, %p227
      %p229 = pneg %p228
      // Predicated region
      $region37: #{tpu_custom_call.1} parent=5 // pred_check
        _
      $region38: #{tpu_custom_call.1} parent=5 // pred_check_branch
        %231 = sbr.rel (%p228) target = $region40
      $region39: #{tpu_custom_call.1} parent=5 // pred_region
        %s232 = ssub.s32 %s18, 1
        %s233 = sand.u32 %s31, 1
        %s234 = scalar_lea.sflag [#allocation3], %s233
        %s235 = sand.u32 %s31, 1
        %s236 = smul.addr %s235, 32
        %s237 = scalar_lea.vmem [#allocation2], %s236
        // Predicated region
        $region41: #{tpu_custom_call.1} parent=39 // pred_check
          %p238 = pneg %p44
        $region42: #{tpu_custom_call.1} parent=39 // pred_check_branch
          %240 = sbr.rel (%p238) target = $region44
        $region43: #{tpu_custom_call.1} parent=39 // pred_region
          %241 = dma.done %s234, 512
        $region44: #{tpu_custom_call.1} parent=39 // pred_fallthru
          _
        // Predicated region
        $region45: #{tpu_custom_call.1} parent=39 // pred_check
          %p242 = pneg %p65
        $region46: #{tpu_custom_call.1} parent=39 // pred_check_branch
          %244 = sbr.rel (%p242) target = $region48
        $region47: #{tpu_custom_call.1} parent=39 // pred_region
          %245 = dma.done [#allocation6], 9216
        $region48: #{tpu_custom_call.1} parent=39 // pred_fallthru
          _
        // Predicated region
        $region49: #{tpu_custom_call.1} parent=39 // pred_check
          %p246 = pneg %p107
        $region50: #{tpu_custom_call.1} parent=39 // pred_check_branch
          %248 = sbr.rel (%p246) target = $region52
        $region51: #{tpu_custom_call.1} parent=39 // pred_region
          %249 = dma.done [#allocation6], 1024
        $region52: #{tpu_custom_call.1} parent=39 // pred_fallthru
          _
        %s250 = sand.u32 %s31, 1
        %s251 = scalar_lea.sflag [#allocation3], %s250
        %s252 = sand.u32 %s31, 1
        %s253 = smul.addr %s252, 32
        %s254 = scalar_lea.vmem [#allocation2], %s253
        %p255 = pneg %p44
        %p256 = pneg %p41
        %p257 = pneg %p65
        %p258 = pneg %p62
        %p259 = pneg %p86
        %p260 = pneg %p83
        %p261 = pneg %p107
        %p262 = pneg %p104
        %p263 = pneg %p128
        %p264 = pneg %p125
        %p265 = pneg %p154
        %p266 = pneg %p151
        %s267 = sand.u32 %s141, 1
        %s268 = scalar_lea.sflag [#allocation4], %s267
        %s269 = sand.u32 %s141, 1
        %s270 = smul.addr %s269, 16
        %s271 = scalar_lea.vmem [#allocation8], %s270
        %v273 = vld [vmem:[#allocation5] sm:$0xf]
        %v274 = vld [vmem:[#allocation5 + $0x4] sm:$0xf]
        %v275 = vld [vmem:[#allocation5 + $0x8] sm:$0xf]
        %v276 = vld [vmem:[#allocation5 + $0xc] sm:$0xf]
        %v277 = vld [vmem:[#allocation5 + $0x10] sm:$0xf]
        %v278 = vld [vmem:[#allocation5 + $0x14] sm:$0xf]
        %v279 = vld [vmem:[#allocation5 + $0x18] sm:$0xf]
        %v280 = vld [vmem:[#allocation5 + $0x1c] sm:$0xf]
        %v281 = vld [vmem:[#allocation5 + $0x20] sm:$0xf]
        %v282 = vld [vmem:[#allocation5 + $0x24] sm:$0xf]
        %v283 = vld [vmem:[#allocation5 + $0x28] sm:$0xf]
        %v284 = vld [vmem:[#allocation5 + $0x2c] sm:$0xf]
        %v285 = vld [vmem:[#allocation5 + $0x30] sm:$0xf]
        %v286 = vld [vmem:[#allocation5 + $0x34] sm:$0xf]
        %v287 = vld [vmem:[#allocation5 + $0x38] sm:$0xf]
        %v288 = vld [vmem:[#allocation5 + $0x3c] sm:$0xf]
        %v289 = vld [vmem:[#allocation5 + $0x40] sm:$0xf]
        %v290 = vld [vmem:[#allocation5 + $0x44] sm:$0xf]
        %v291 = vld [vmem:[#allocation5 + $0x48] sm:$0xf]
        %v292 = vld [vmem:[#allocation5 + $0x4c] sm:$0xf]
        %v293 = vld [vmem:[#allocation5 + $0x50] sm:$0xf]
        %v294 = vld [vmem:[#allocation5 + $0x54] sm:$0xf]
        %v295 = vld [vmem:[#allocation5 + $0x58] sm:$0xf]
        %v296 = vld [vmem:[#allocation5 + $0x5c] sm:$0xf]
        %v297 = vld [vmem:[#allocation5 + $0x60] sm:$0xf]
        %v298 = vld [vmem:[#allocation5 + $0x64] sm:$0xf]
        %v299 = vld [vmem:[#allocation5 + $0x68] sm:$0xf]
        %v300 = vld [vmem:[#allocation5 + $0x6c] sm:$0xf]
        %v301 = vld [vmem:[#allocation5 + $0x70] sm:$0xf]
        %v302 = vld [vmem:[#allocation5 + $0x74] sm:$0xf]
        %v303 = vld [vmem:[#allocation5 + $0x78] sm:$0xf]
        %v304 = vld [vmem:[#allocation5 + $0x7c] sm:$0xf]
        %v305 = vld [vmem:[#allocation5 + $0x80] sm:$0xf]
        %v306 = vld [vmem:[#allocation5 + $0x84] sm:$0xf]
        %v307 = vld [vmem:[#allocation5 + $0x88] sm:$0xf]
        %v308 = vld [vmem:[#allocation5 + $0x8c] sm:$0xf]
        %v309 = vld [vmem:[#allocation5 + $0x90] sm:$0xf]
        %v310 = vld [vmem:[#allocation5 + $0x94] sm:$0xf]
        %v311 = vld [vmem:[#allocation5 + $0x98] sm:$0xf]
        %v312 = vld [vmem:[#allocation5 + $0x9c] sm:$0xf]
        %v313 = vld [vmem:[#allocation5 + $0xa0] sm:$0xf]
        %v314 = vld [vmem:[#allocation5 + $0xa4] sm:$0xf]
        %v315 = vld [vmem:[#allocation5 + $0xa8] sm:$0xf]
        %v316 = vld [vmem:[#allocation5 + $0xac] sm:$0xf]
        %v317 = vld [vmem:[#allocation5 + $0xb0] sm:$0xf]
        %v318 = vld [vmem:[#allocation5 + $0xb4] sm:$0xf]
        %v319 = vld [vmem:[#allocation5 + $0xb8] sm:$0xf]
        %v320 = vld [vmem:[#allocation5 + $0xbc] sm:$0xf]
        %v321 = vld [vmem:[#allocation5 + $0xc0] sm:$0xf]
        %v322 = vld [vmem:[#allocation5 + $0xc4] sm:$0xf]
        %v323 = vld [vmem:[#allocation5 + $0xc8] sm:$0xf]
        %v324 = vld [vmem:[#allocation5 + $0xcc] sm:$0xf]
        %v325 = vld [vmem:[#allocation5 + $0xd0] sm:$0xf]
        %v326 = vld [vmem:[#allocation5 + $0xd4] sm:$0xf]
        %v327 = vld [vmem:[#allocation5 + $0xd8] sm:$0xf]
        %v328 = vld [vmem:[#allocation5 + $0xdc] sm:$0xf]
        %v329 = vld [vmem:[#allocation5 + $0xe0] sm:$0xf]
        %v330 = vld [vmem:[#allocation5 + $0xe4] sm:$0xf]
        %v331 = vld [vmem:[#allocation5 + $0xe8] sm:$0xf]
        %v332 = vld [vmem:[#allocation5 + $0xec] sm:$0xf]
        %v333 = vld [vmem:[#allocation5 + $0xf0] sm:$0xf]
        %v334 = vld [vmem:[#allocation5 + $0xf4] sm:$0xf]
        %v335 = vld [vmem:[#allocation5 + $0xf8] sm:$0xf]
        %v336 = vld [vmem:[#allocation5 + $0xfc] sm:$0xf]
        %v337 = vld [vmem:[#allocation5 + $0x100] sm:$0xf]
        %v338 = vld [vmem:[#allocation5 + $0x104] sm:$0xf]
        %v339 = vld [vmem:[#allocation5 + $0x108] sm:$0xf]
        %v340 = vld [vmem:[#allocation5 + $0x10c] sm:$0xf]
        %v341 = vld [vmem:[#allocation5 + $0x110] sm:$0xf]
        %v342 = vld [vmem:[#allocation5 + $0x114] sm:$0xf]
        %v343 = vld [vmem:[#allocation5 + $0x118] sm:$0xf]
        %v344 = vld [vmem:[#allocation5 + $0x11c] sm:$0xf]
        %v345 = vld [vmem:[#allocation5 + $0x120] sm:$0xf]
        %v346 = vld [vmem:[#allocation5 + $0x124] sm:$0xf]
        %v347 = vld [vmem:[#allocation5 + $0x128] sm:$0xf]
        %v348 = vld [vmem:[#allocation5 + $0x12c] sm:$0xf]
        %v349 = vld [vmem:[#allocation5 + $0x130] sm:$0xf]
        %v350 = vld [vmem:[#allocation5 + $0x134] sm:$0xf]
        %v351 = vld [vmem:[#allocation5 + $0x138] sm:$0xf]
        %v352 = vld [vmem:[#allocation5 + $0x13c] sm:$0xf]
        %v353 = vld [vmem:[#allocation5 + $0x140] sm:$0xf]
        %v354 = vld [vmem:[#allocation5 + $0x144] sm:$0xf]
        %v355 = vld [vmem:[#allocation5 + $0x148] sm:$0xf]
        %v356 = vld [vmem:[#allocation5 + $0x14c] sm:$0xf]
        %v357 = vld [vmem:[#allocation5 + $0x150] sm:$0xf]
        %v358 = vld [vmem:[#allocation5 + $0x154] sm:$0xf]
        %v359 = vld [vmem:[#allocation5 + $0x158] sm:$0xf]
        %v360 = vld [vmem:[#allocation5 + $0x15c] sm:$0xf]
        %v361 = vld [vmem:[#allocation5 + $0x160] sm:$0xf]
        %v362 = vld [vmem:[#allocation5 + $0x164] sm:$0xf]
        %v363 = vld [vmem:[#allocation5 + $0x168] sm:$0xf]
        %v364 = vld [vmem:[#allocation5 + $0x16c] sm:$0xf]
        %v365 = vld [vmem:[#allocation5 + $0x170] sm:$0xf]
        %v366 = vld [vmem:[#allocation5 + $0x174] sm:$0xf]
        %v367 = vld [vmem:[#allocation5 + $0x178] sm:$0xf]
        %v368 = vld [vmem:[#allocation5 + $0x17c] sm:$0xf]
        %v369 = vld [vmem:[#allocation5 + $0x180] sm:$0xf]
        %v370 = vld [vmem:[#allocation5 + $0x184] sm:$0xf]
        %v371 = vld [vmem:[#allocation5 + $0x188] sm:$0xf]
        %v372 = vld [vmem:[#allocation5 + $0x18c] sm:$0xf]
        %v373 = vld [vmem:[#allocation5 + $0x190] sm:$0xf]
        %v374 = vld [vmem:[#allocation5 + $0x194] sm:$0xf]
        %v375 = vld [vmem:[#allocation5 + $0x198] sm:$0xf]
        %v376 = vld [vmem:[#allocation5 + $0x19c] sm:$0xf]
        %v377 = vld [vmem:[#allocation5 + $0x1a0] sm:$0xf]
        %v378 = vld [vmem:[#allocation5 + $0x1a4] sm:$0xf]
        %v379 = vld [vmem:[#allocation5 + $0x1a8] sm:$0xf]
        %v380 = vld [vmem:[#allocation5 + $0x1ac] sm:$0xf]
        %v381 = vld [vmem:[#allocation5 + $0x1b0] sm:$0xf]
        %v382 = vld [vmem:[#allocation5 + $0x1b4] sm:$0xf]
        %v383 = vld [vmem:[#allocation5 + $0x1b8] sm:$0xf]
        %v384 = vld [vmem:[#allocation5 + $0x1bc] sm:$0xf]
        %v385 = vld [vmem:[#allocation5 + $0x1c0] sm:$0xf]
        %v386 = vld [vmem:[#allocation5 + $0x1c4] sm:$0xf]
        %v387 = vld [vmem:[#allocation5 + $0x1c8] sm:$0xf]
        %v388 = vld [vmem:[#allocation5 + $0x1cc] sm:$0xf]
        %v389 = vld [vmem:[#allocation5 + $0x1d0] sm:$0xf]
        %v390 = vld [vmem:[#allocation5 + $0x1d4] sm:$0xf]
        %v391 = vld [vmem:[#allocation5 + $0x1d8] sm:$0xf]
        %v392 = vld [vmem:[#allocation5 + $0x1dc] sm:$0xf]
        %v393 = vld [vmem:[#allocation5 + $0x1e0] sm:$0xf]
        %v394 = vld [vmem:[#allocation5 + $0x1e4] sm:$0xf]
        %v395 = vld [vmem:[#allocation5 + $0x1e8] sm:$0xf]
        %v396 = vld [vmem:[#allocation5 + $0x1ec] sm:$0xf]
        %v397 = vld [vmem:[#allocation5 + $0x1f0] sm:$0xf]
        %v398 = vld [vmem:[#allocation5 + $0x1f4] sm:$0xf]
        %v399 = vld [vmem:[#allocation5 + $0x1f8] sm:$0xf]
        %v400 = vld [vmem:[#allocation5 + $0x1fc] sm:$0xf]
        %v401 = vld [vmem:[#allocation5 + $0x200] sm:$0xf]
        %v402 = vld [vmem:[#allocation5 + $0x204] sm:$0xf]
        %v403 = vld [vmem:[#allocation5 + $0x208] sm:$0xf]
        %v404 = vld [vmem:[#allocation5 + $0x20c] sm:$0xf]
        %v405 = vld [vmem:[#allocation5 + $0x210] sm:$0xf]
        %v406 = vld [vmem:[#allocation5 + $0x214] sm:$0xf]
        %v407 = vld [vmem:[#allocation5 + $0x218] sm:$0xf]
        %v408 = vld [vmem:[#allocation5 + $0x21c] sm:$0xf]
        %v409 = vld [vmem:[#allocation5 + $0x220] sm:$0xf]
        %v410 = vld [vmem:[#allocation5 + $0x224] sm:$0xf]
        %v411 = vld [vmem:[#allocation5 + $0x228] sm:$0xf]
        %v412 = vld [vmem:[#allocation5 + $0x22c] sm:$0xf]
        %v413 = vld [vmem:[#allocation5 + $0x230] sm:$0xf]
        %v414 = vld [vmem:[#allocation5 + $0x234] sm:$0xf]
        %v415 = vld [vmem:[#allocation5 + $0x238] sm:$0xf]
        %v416 = vld [vmem:[#allocation5 + $0x23c] sm:$0xf]
        %v417 = vld [vmem:[#allocation7] sm:$0xf]
        %v418 = vld [vmem:[#allocation7 + $0x4] sm:$0xf]
        %v419 = vld [vmem:[#allocation7 + $0x8] sm:$0xf]
        %v420 = vld [vmem:[#allocation7 + $0xc] sm:$0xf]
        %v421 = vld [vmem:[#allocation7 + $0x10] sm:$0xf]
        %v422 = vld [vmem:[#allocation7 + $0x14] sm:$0xf]
        %v423 = vld [vmem:[#allocation7 + $0x18] sm:$0xf]
        %v424 = vld [vmem:[#allocation7 + $0x1c] sm:$0xf]
        %v425 = vld [vmem:[#allocation7 + $0x20] sm:$0xf]
        %v426 = vld [vmem:[#allocation7 + $0x24] sm:$0xf]
        %v427 = vld [vmem:[#allocation7 + $0x28] sm:$0xf]
        %v428 = vld [vmem:[#allocation7 + $0x2c] sm:$0xf]
        %v429 = vld [vmem:[#allocation7 + $0x30] sm:$0xf]
        %v430 = vld [vmem:[#allocation7 + $0x34] sm:$0xf]
        %v431 = vld [vmem:[#allocation7 + $0x38] sm:$0xf]
        %v432 = vld [vmem:[#allocation7 + $0x3c] sm:$0xf]
        %v433 = vld [vmem:[%s2] sm:$0x1]
        %v434 = vld [vmem:[%s4] sm:$0x1]
        %v435 = vld [vmem:[%s237 + $0x4] sm:$0xff]
        %v436 = vld [vmem:[%s237 + $0xc] sm:$0xff]
        %v437 = vpack.c.bf16 %v436, %v435
        %v438 = vld [vmem:[%s237 + $0x5] sm:$0xff]
        %v439 = vld [vmem:[%s237 + $0xd] sm:$0xff]
        %v440 = vpack.c.bf16 %v439, %v438
        %v441 = vld [vmem:[%s237 + $0x6] sm:$0xff]
        %v442 = vld [vmem:[%s237 + $0xe] sm:$0xff]
        %v443 = vpack.c.bf16 %v442, %v441
        %v444 = vld [vmem:[%s237 + $0x7] sm:$0xff]
        %v445 = vld [vmem:[%s237 + $0xf] sm:$0xff]
        %v446 = vpack.c.bf16 %v445, %v444
        %v447 = vld [vmem:[%s237 + $0x8] sm:$0xff]
        %v448 = vld [vmem:[%s237 + $0x10] sm:$0xff]
        %v449 = vpack.c.bf16 %v448, %v447
        %v450 = vld [vmem:[%s237 + $0x9] sm:$0xff]
        %v451 = vld [vmem:[%s237 + $0x11] sm:$0xff]
        %v452 = vpack.c.bf16 %v451, %v450
        %v453 = vld [vmem:[%s237 + $0xa] sm:$0xff]
        %v454 = vld [vmem:[%s237 + $0x12] sm:$0xff]
        %v455 = vpack.c.bf16 %v454, %v453
        %v456 = vld [vmem:[%s237 + $0xb] sm:$0xff]
        %v457 = vld [vmem:[%s237 + $0x13] sm:$0xff]
        %v458 = vpack.c.bf16 %v457, %v456
        %v459 = vld [vmem:[%s237 + $0x14] sm:$0xff]
        %v460 = vpack.c.bf16 %v459, %v436
        %v462 = vlaneseq
        %v463 = vshrl.u32 %v462, 7
        %v464 = vsub.s32 0, %v463
        %v465 = vrot.slane %v433, %v464
        %v611 = vunpack.c.l.b16 %v273
        %v612 = vunpack.c.l.b16 %v274
        %v613 = vunpack.c.l.b16 %v275
        %v614 = vunpack.c.l.b16 %v276
        %v615 = vunpack.c.l.b16 %v277
        %v616 = vunpack.c.l.b16 %v278
        %v617 = vunpack.c.l.b16 %v279
        %v618 = vunpack.c.l.b16 %v280
        %v619 = vunpack.c.l.b16 %v281
        %v620 = vunpack.c.l.b16 %v282
        %v621 = vunpack.c.l.b16 %v283
        %v622 = vunpack.c.l.b16 %v284
        %v623 = vunpack.c.l.b16 %v285
        %v624 = vunpack.c.l.b16 %v286
        %v625 = vunpack.c.l.b16 %v287
        %v626 = vunpack.c.l.b16 %v288
        %v627 = vunpack.c.l.b16 %v289
        %v628 = vunpack.c.l.b16 %v290
        %v629 = vunpack.c.l.b16 %v291
        %v630 = vunpack.c.l.b16 %v292
        %v631 = vunpack.c.l.b16 %v293
        %v632 = vunpack.c.l.b16 %v294
        %v633 = vunpack.c.l.b16 %v295
        %v634 = vunpack.c.l.b16 %v296
        %v635 = vunpack.c.l.b16 %v297
        %v636 = vunpack.c.l.b16 %v298
        %v637 = vunpack.c.l.b16 %v299
        %v638 = vunpack.c.l.b16 %v300
        %v639 = vunpack.c.l.b16 %v301
        %v640 = vunpack.c.l.b16 %v302
        %v641 = vunpack.c.l.b16 %v303
        %v642 = vunpack.c.l.b16 %v304
        %v643 = vunpack.c.l.b16 %v305
        %v644 = vunpack.c.l.b16 %v306
        %v645 = vunpack.c.l.b16 %v307
        %v646 = vunpack.c.l.b16 %v308
        %v647 = vunpack.c.l.b16 %v309
        %v648 = vunpack.c.l.b16 %v310
        %v649 = vunpack.c.l.b16 %v311
        %v650 = vunpack.c.l.b16 %v312
        %v651 = vunpack.c.l.b16 %v313
        %v652 = vunpack.c.l.b16 %v314
        %v653 = vunpack.c.l.b16 %v315
        %v654 = vunpack.c.l.b16 %v316
        %v655 = vunpack.c.l.b16 %v317
        %v656 = vunpack.c.l.b16 %v318
        %v657 = vunpack.c.l.b16 %v319
        %v658 = vunpack.c.l.b16 %v320
        %v659 = vunpack.c.l.b16 %v321
        %v660 = vunpack.c.l.b16 %v322
        %v661 = vunpack.c.l.b16 %v323
        %v662 = vunpack.c.l.b16 %v324
        %v663 = vunpack.c.l.b16 %v325
        %v664 = vunpack.c.l.b16 %v326
        %v665 = vunpack.c.l.b16 %v327
        %v666 = vunpack.c.l.b16 %v328
        %v667 = vunpack.c.l.b16 %v329
        %v668 = vunpack.c.l.b16 %v330
        %v669 = vunpack.c.l.b16 %v331
        %v670 = vunpack.c.l.b16 %v332
        %v671 = vunpack.c.l.b16 %v333
        %v672 = vunpack.c.l.b16 %v334
        %v673 = vunpack.c.l.b16 %v335
        %v674 = vunpack.c.l.b16 %v336
        %v675 = vunpack.c.l.b16 %v337
        %v676 = vunpack.c.l.b16 %v338
        %v677 = vunpack.c.l.b16 %v339
        %v678 = vunpack.c.l.b16 %v340
        %v679 = vunpack.c.l.b16 %v341
        %v680 = vunpack.c.l.b16 %v342
        %v681 = vunpack.c.l.b16 %v343
        %v682 = vunpack.c.l.b16 %v344
        %v683 = vunpack.c.l.b16 %v345
        %v684 = vunpack.c.l.b16 %v346
        %v685 = vunpack.c.l.b16 %v347
        %v686 = vunpack.c.l.b16 %v348
        %v687 = vunpack.c.l.b16 %v349
        %v688 = vunpack.c.l.b16 %v350
        %v689 = vunpack.c.l.b16 %v351
        %v690 = vunpack.c.l.b16 %v352
        %v691 = vunpack.c.l.b16 %v353
        %v692 = vunpack.c.l.b16 %v354
        %v693 = vunpack.c.l.b16 %v355
        %v694 = vunpack.c.l.b16 %v356
        %v695 = vunpack.c.l.b16 %v357
        %v696 = vunpack.c.l.b16 %v358
        %v697 = vunpack.c.l.b16 %v359
        %v698 = vunpack.c.l.b16 %v360
        %v699 = vunpack.c.l.b16 %v361
        %v700 = vunpack.c.l.b16 %v362
        %v701 = vunpack.c.l.b16 %v363
        %v702 = vunpack.c.l.b16 %v364
        %v703 = vunpack.c.l.b16 %v365
        %v704 = vunpack.c.l.b16 %v366
        %v705 = vunpack.c.l.b16 %v367
        %v706 = vunpack.c.l.b16 %v368
        %v707 = vunpack.c.l.b16 %v369
        %v708 = vunpack.c.l.b16 %v370
        %v709 = vunpack.c.l.b16 %v371
        %v710 = vunpack.c.l.b16 %v372
        %v711 = vunpack.c.l.b16 %v373
        %v712 = vunpack.c.l.b16 %v374
        %v713 = vunpack.c.l.b16 %v375
        %v714 = vunpack.c.l.b16 %v376
        %v715 = vunpack.c.l.b16 %v377
        %v716 = vunpack.c.l.b16 %v378
        %v717 = vunpack.c.l.b16 %v379
        %v718 = vunpack.c.l.b16 %v380
        %v719 = vunpack.c.l.b16 %v381
        %v720 = vunpack.c.l.b16 %v382
        %v721 = vunpack.c.l.b16 %v383
        %v722 = vunpack.c.l.b16 %v384
        %v723 = vunpack.c.l.b16 %v385
        %v724 = vunpack.c.l.b16 %v386
        %v725 = vunpack.c.l.b16 %v387
        %v726 = vunpack.c.l.b16 %v388
        %v727 = vunpack.c.l.b16 %v389
        %v728 = vunpack.c.l.b16 %v390
        %v729 = vunpack.c.l.b16 %v391
        %v730 = vunpack.c.l.b16 %v392
        %v731 = vunpack.c.l.b16 %v393
        %v732 = vunpack.c.l.b16 %v394
        %v733 = vunpack.c.l.b16 %v395
        %v734 = vunpack.c.l.b16 %v396
        %v735 = vunpack.c.l.b16 %v397
        %v736 = vunpack.c.l.b16 %v398
        %v737 = vunpack.c.l.b16 %v399
        %v738 = vunpack.c.l.b16 %v400
        %v739 = vunpack.c.l.b16 %v401
        %v740 = vunpack.c.l.b16 %v402
        %v741 = vunpack.c.l.b16 %v403
        %v742 = vunpack.c.l.b16 %v404
        %v743 = vunpack.c.l.b16 %v405
        %v744 = vunpack.c.l.b16 %v406
        %v745 = vunpack.c.l.b16 %v407
        %v746 = vunpack.c.l.b16 %v408
        %v747 = vunpack.c.l.b16 %v409
        %v748 = vunpack.c.l.b16 %v410
        %v749 = vunpack.c.l.b16 %v411
        %v750 = vunpack.c.l.b16 %v412
        %v751 = vunpack.c.l.b16 %v413
        %v752 = vunpack.c.l.b16 %v414
        %v753 = vunpack.c.l.b16 %v415
        %v754 = vunpack.c.l.b16 %v416
        %v755 = vpack.c.b16 %v612, %v611
        %v756 = vpack.c.b16 %v614, %v613
        %v757 = vpack.c.b16 %v616, %v615
        %v758 = vpack.c.b16 %v618, %v617
        %v759 = vpack.c.b16 %v620, %v619
        %v760 = vpack.c.b16 %v622, %v621
        %v761 = vpack.c.b16 %v624, %v623
        %v762 = vpack.c.b16 %v626, %v625
        %v763 = vpack.c.b16 %v628, %v627
        %v764 = vpack.c.b16 %v630, %v629
        %v765 = vpack.c.b16 %v632, %v631
        %v766 = vpack.c.b16 %v634, %v633
        %v767 = vpack.c.b16 %v636, %v635
        %v768 = vpack.c.b16 %v638, %v637
        %v769 = vpack.c.b16 %v640, %v639
        %v770 = vpack.c.b16 %v642, %v641
        %v771 = vpack.c.b16 %v644, %v643
        %v772 = vpack.c.b16 %v646, %v645
        %v773 = vpack.c.b16 %v648, %v647
        %v774 = vpack.c.b16 %v650, %v649
        %v775 = vpack.c.b16 %v652, %v651
        %v776 = vpack.c.b16 %v654, %v653
        %v777 = vpack.c.b16 %v656, %v655
        %v778 = vpack.c.b16 %v658, %v657
        %v779 = vpack.c.b16 %v660, %v659
        %v780 = vpack.c.b16 %v662, %v661
        %v781 = vpack.c.b16 %v664, %v663
        %v782 = vpack.c.b16 %v666, %v665
        %v783 = vpack.c.b16 %v668, %v667
        %v784 = vpack.c.b16 %v670, %v669
        %v785 = vpack.c.b16 %v672, %v671
        %v786 = vpack.c.b16 %v674, %v673
        %v787 = vpack.c.b16 %v676, %v675
        %v788 = vpack.c.b16 %v678, %v677
        %v789 = vpack.c.b16 %v680, %v679
        %v790 = vpack.c.b16 %v682, %v681
        %v791 = vpack.c.b16 %v684, %v683
        %v792 = vpack.c.b16 %v686, %v685
        %v793 = vpack.c.b16 %v688, %v687
        %v794 = vpack.c.b16 %v690, %v689
        %v795 = vpack.c.b16 %v692, %v691
        %v796 = vpack.c.b16 %v694, %v693
        %v797 = vpack.c.b16 %v696, %v695
        %v798 = vpack.c.b16 %v698, %v697
        %v799 = vpack.c.b16 %v700, %v699
        %v800 = vpack.c.b16 %v702, %v701
        %v801 = vpack.c.b16 %v704, %v703
        %v802 = vpack.c.b16 %v706, %v705
        %v803 = vpack.c.b16 %v708, %v707
        %v804 = vpack.c.b16 %v710, %v709
        %v805 = vpack.c.b16 %v712, %v711
        %v806 = vpack.c.b16 %v714, %v713
        %v807 = vpack.c.b16 %v716, %v715
        %v808 = vpack.c.b16 %v718, %v717
        %v809 = vpack.c.b16 %v720, %v719
        %v810 = vpack.c.b16 %v722, %v721
        %v811 = vpack.c.b16 %v724, %v723
        %v812 = vpack.c.b16 %v726, %v725
        %v813 = vpack.c.b16 %v728, %v727
        %v814 = vpack.c.b16 %v730, %v729
        %v815 = vpack.c.b16 %v732, %v731
        %v816 = vpack.c.b16 %v734, %v733
        %v817 = vpack.c.b16 %v736, %v735
        %v818 = vpack.c.b16 %v738, %v737
        %v819 = vpack.c.b16 %v740, %v739
        %v820 = vpack.c.b16 %v742, %v741
        %v821 = vpack.c.b16 %v744, %v743
        %v822 = vpack.c.b16 %v746, %v745
        %v823 = vpack.c.b16 %v748, %v747
        %v824 = vpack.c.b16 %v750, %v749
        %v825 = vpack.c.b16 %v752, %v751
        %v826 = vpack.c.b16 %v754, %v753
        %899 = vmatprep.subr.bf16.mxu0 0
        %900 = vmatpush1.bf16.msra.mxu0 %v762
        %901 = vmatprep.subr.bf16.mxu0 0
        %902 = vmatpush1.bf16.msra.mxu0 %v761
        %903 = vmatprep.subr.bf16.mxu0 0
        %904 = vmatpush1.bf16.msra.mxu0 %v760
        %905 = vmatprep.subr.bf16.mxu0 0
        %906 = vmatpush1.bf16.msra.mxu0 %v759
        %907 = vmatprep.subr.bf16.mxu0 0
        %908 = vmatpush1.bf16.msra.mxu0 %v758
        %909 = vmatprep.subr.bf16.mxu0 0
        %910 = vmatpush1.bf16.msra.mxu0 %v757
        %911 = vmatprep.subr.bf16.mxu0 0
        %912 = vmatpush1.bf16.msra.mxu0 %v756
        %913 = vmatprep.subr.bf16.mxu0 0
        %914 = vmatpush1.bf16.msra.mxu0 %v755
        %915 = vmatprep.subr.bf16.mxu0 0
        %916 = vmatpush2.bf16.msra.mxu0 %v770
        %917 = vmatprep.subr.bf16.mxu0 0
        %918 = vmatpush2.bf16.msra.mxu0 %v769
        %919 = vmatprep.subr.bf16.mxu0 0
        %920 = vmatpush2.bf16.msra.mxu0 %v768
        %921 = vmatprep.subr.bf16.mxu0 0
        %922 = vmatpush2.bf16.msra.mxu0 %v767
        %923 = vmatprep.subr.bf16.mxu0 0
        %924 = vmatpush2.bf16.msra.mxu0 %v766
        %925 = vmatprep.subr.bf16.mxu0 0
        %926 = vmatpush2.bf16.msra.mxu0 %v765
        %927 = vmatprep.subr.bf16.mxu0 0
        %928 = vmatpush2.bf16.msra.mxu0 %v764
        %929 = vmatprep.subr.bf16.mxu0 0
        %930 = vmatpush2.bf16.msra.mxu0 %v763
        %931 = vmatprep.mubr.bf16.mxu0 %v440
        %932 = vmatmul.mubr.bf16.gmra.mxu0 %v437
        %v933 = vpop.f32.mrf.mxu0
        %v934 = vadd.f32 %v465, %v933
        %v935 = vpop.f32.mrf.mxu0
        %v936 = vpop.f32.mrf.mxu0
        %v937 = vadd.f32 %v465, %v936
        %v938 = vpop.f32.mrf.mxu0
        %939 = vdwg.mxu0
        %940 = vmatprep.subr.bf16.mxu0 0
        %941 = vmatpush1.bf16.msra.mxu0 %v778
        %942 = vmatprep.subr.bf16.mxu0 0
        %943 = vmatpush1.bf16.msra.mxu0 %v777
        %944 = vmatprep.subr.bf16.mxu0 0
        %945 = vmatpush1.bf16.msra.mxu0 %v776
        %946 = vmatprep.subr.bf16.mxu0 0
        %947 = vmatpush1.bf16.msra.mxu0 %v775
        %948 = vmatprep.subr.bf16.mxu0 0
        %949 = vmatpush1.bf16.msra.mxu0 %v774
        %950 = vmatprep.subr.bf16.mxu0 0
        %951 = vmatpush1.bf16.msra.mxu0 %v773
        %952 = vmatprep.subr.bf16.mxu0 0
        %953 = vmatpush1.bf16.msra.mxu0 %v772
        %954 = vmatprep.subr.bf16.mxu0 0
        %955 = vmatpush1.bf16.msra.mxu0 %v771
        %956 = vmatprep.subr.bf16.mxu0 0
        %957 = vmatpush2.bf16.msra.mxu0 %v786
        %958 = vmatprep.subr.bf16.mxu0 0
        %959 = vmatpush2.bf16.msra.mxu0 %v785
        %960 = vmatprep.subr.bf16.mxu0 0
        %961 = vmatpush2.bf16.msra.mxu0 %v784
        %962 = vmatprep.subr.bf16.mxu0 0
        %963 = vmatpush2.bf16.msra.mxu0 %v783
        %964 = vmatprep.subr.bf16.mxu0 0
        %965 = vmatpush2.bf16.msra.mxu0 %v782
        %966 = vmatprep.subr.bf16.mxu0 0
        %967 = vmatpush2.bf16.msra.mxu0 %v781
        %968 = vmatprep.subr.bf16.mxu0 0
        %969 = vmatpush2.bf16.msra.mxu0 %v780
        %970 = vmatprep.subr.bf16.mxu0 0
        %971 = vmatpush2.bf16.msra.mxu0 %v779
        %972 = vmatprep.mubr.bf16.mxu0 %v446
        %973 = vmatmul.mubr.bf16.gmra.mxu0 %v443
        %v974 = vpop.f32.mrf.mxu0
        %v975 = vadd.f32 %v934, %v974
        %v976 = vpop.f32.mrf.mxu0
        %v977 = vpop.f32.mrf.mxu0
        %v978 = vadd.f32 %v937, %v977
        %v979 = vpop.f32.mrf.mxu0
        %980 = vdwg.mxu0
        %981 = vmatprep.subr.bf16.mxu0 0
        %982 = vmatpush1.bf16.msra.mxu0 %v794
        %983 = vmatprep.subr.bf16.mxu0 0
        %984 = vmatpush1.bf16.msra.mxu0 %v793
        %985 = vmatprep.subr.bf16.mxu0 0
        %986 = vmatpush1.bf16.msra.mxu0 %v792
        %987 = vmatprep.subr.bf16.mxu0 0
        %988 = vmatpush1.bf16.msra.mxu0 %v791
        %989 = vmatprep.subr.bf16.mxu0 0
        %990 = vmatpush1.bf16.msra.mxu0 %v790
        %991 = vmatprep.subr.bf16.mxu0 0
        %992 = vmatpush1.bf16.msra.mxu0 %v789
        %993 = vmatprep.subr.bf16.mxu0 0
        %994 = vmatpush1.bf16.msra.mxu0 %v788
        %995 = vmatprep.subr.bf16.mxu0 0
        %996 = vmatpush1.bf16.msra.mxu0 %v787
        %997 = vmatprep.subr.bf16.mxu0 0
        %998 = vmatpush2.bf16.msra.mxu0 %v802
        %999 = vmatprep.subr.bf16.mxu0 0
        %1000 = vmatpush2.bf16.msra.mxu0 %v801
        %1001 = vmatprep.subr.bf16.mxu0 0
        %1002 = vmatpush2.bf16.msra.mxu0 %v800
        %1003 = vmatprep.subr.bf16.mxu0 0
        %1004 = vmatpush2.bf16.msra.mxu0 %v799
        %1005 = vmatprep.subr.bf16.mxu0 0
        %1006 = vmatpush2.bf16.msra.mxu0 %v798
        %1007 = vmatprep.subr.bf16.mxu0 0
        %1008 = vmatpush2.bf16.msra.mxu0 %v797
        %1009 = vmatprep.subr.bf16.mxu0 0
        %1010 = vmatpush2.bf16.msra.mxu0 %v796
        %1011 = vmatprep.subr.bf16.mxu0 0
        %1012 = vmatpush2.bf16.msra.mxu0 %v795
        %1013 = vmatprep.mubr.bf16.mxu0 %v452
        %1014 = vmatmul.mubr.bf16.gmra.mxu0 %v449
        %v1015 = vpop.f32.mrf.mxu0
        %v1016 = vadd.f32 %v975, %v1015
        %v1017 = vpop.f32.mrf.mxu0
        %v1018 = vpop.f32.mrf.mxu0
        %v1019 = vadd.f32 %v978, %v1018
        %v1020 = vpop.f32.mrf.mxu0
        %1021 = vdwg.mxu0
        %1022 = vmatprep.subr.bf16.mxu0 0
        %1023 = vmatpush1.bf16.msra.mxu0 %v810
        %1024 = vmatprep.subr.bf16.mxu0 0
        %1025 = vmatpush1.bf16.msra.mxu0 %v809
        %1026 = vmatprep.subr.bf16.mxu0 0
        %1027 = vmatpush1.bf16.msra.mxu0 %v808
        %1028 = vmatprep.subr.bf16.mxu0 0
        %1029 = vmatpush1.bf16.msra.mxu0 %v807
        %1030 = vmatprep.subr.bf16.mxu0 0
        %1031 = vmatpush1.bf16.msra.mxu0 %v806
        %1032 = vmatprep.subr.bf16.mxu0 0
        %1033 = vmatpush1.bf16.msra.mxu0 %v805
        %1034 = vmatprep.subr.bf16.mxu0 0
        %1035 = vmatpush1.bf16.msra.mxu0 %v804
        %1036 = vmatprep.subr.bf16.mxu0 0
        %1037 = vmatpush1.bf16.msra.mxu0 %v803
        %1038 = vmatprep.subr.bf16.mxu0 0
        %1039 = vmatpush2.bf16.msra.mxu0 %v818
        %1040 = vmatprep.subr.bf16.mxu0 0
        %1041 = vmatpush2.bf16.msra.mxu0 %v817
        %1042 = vmatprep.subr.bf16.mxu0 0
        %1043 = vmatpush2.bf16.msra.mxu0 %v816
        %1044 = vmatprep.subr.bf16.mxu0 0
        %1045 = vmatpush2.bf16.msra.mxu0 %v815
        %1046 = vmatprep.subr.bf16.mxu0 0
        %1047 = vmatpush2.bf16.msra.mxu0 %v814
        %1048 = vmatprep.subr.bf16.mxu0 0
        %1049 = vmatpush2.bf16.msra.mxu0 %v813
        %1050 = vmatprep.subr.bf16.mxu0 0
        %1051 = vmatpush2.bf16.msra.mxu0 %v812
        %1052 = vmatprep.subr.bf16.mxu0 0
        %1053 = vmatpush2.bf16.msra.mxu0 %v811
        %1054 = vmatprep.mubr.bf16.mxu0 %v458
        %1055 = vmatmul.mubr.bf16.gmra.mxu0 %v455
        %v1056 = vpop.f32.mrf.mxu0
        %v1057 = vadd.f32 %v1016, %v1056
        %v1058 = vpop.f32.mrf.mxu0
        %v1059 = vpop.f32.mrf.mxu0
        %v1060 = vadd.f32 %v1019, %v1059
        %v1061 = vpop.f32.mrf.mxu0
        %1062 = vdwg.mxu0
        %1063 = vmatprep.subr.bf16.mxu0 0
        %1064 = vmatpush1.bf16.msra.mxu0 %v826
        %1065 = vmatprep.subr.bf16.mxu0 0
        %1066 = vmatpush1.bf16.msra.mxu0 %v825
        %1067 = vmatprep.subr.bf16.mxu0 0
        %1068 = vmatpush1.bf16.msra.mxu0 %v824
        %1069 = vmatprep.subr.bf16.mxu0 0
        %1070 = vmatpush1.bf16.msra.mxu0 %v823
        %1071 = vmatprep.subr.bf16.mxu0 0
        %1072 = vmatpush1.bf16.msra.mxu0 %v822
        %1073 = vmatprep.subr.bf16.mxu0 0
        %1074 = vmatpush1.bf16.msra.mxu0 %v821
        %1075 = vmatprep.subr.bf16.mxu0 0
        %1076 = vmatpush1.bf16.msra.mxu0 %v820
        %1077 = vmatprep.subr.bf16.mxu0 0
        %1078 = vmatpush1.bf16.msra.mxu0 %v819
        %1079 = vmatprep.subr.bf16.mxu0 0
        %1080 = vmatpush2.bf16.msra.mxu0 0
        %1081 = vmatprep.subr.bf16.mxu0 0
        %1082 = vmatpush2.bf16.msra.mxu0 0
        %1083 = vmatprep.subr.bf16.mxu0 0
        %1084 = vmatpush2.bf16.msra.mxu0 0
        %1085 = vmatprep.subr.bf16.mxu0 0
        %1086 = vmatpush2.bf16.msra.mxu0 0
        %1087 = vmatprep.subr.bf16.mxu0 0
        %1088 = vmatpush2.bf16.msra.mxu0 0
        %1089 = vmatprep.subr.bf16.mxu0 0
        %1090 = vmatpush2.bf16.msra.mxu0 0
        %1091 = vmatprep.subr.bf16.mxu0 0
        %1092 = vmatpush2.bf16.msra.mxu0 0
        %1093 = vmatprep.subr.bf16.mxu0 0
        %1094 = vmatpush2.bf16.msra.mxu0 0
        %1095 = vmatprep.mubr.bf16.mxu0 0
        %1096 = vmatmul.mubr.bf16.gmra.mxu0 %v460
        %v1097 = vpop.f32.mrf.mxu0
        %v1098 = vadd.f32 %v1057, %v1097
        %v1099 = vpop.f32.mrf.mxu0
        %v1100 = vpop.f32.mrf.mxu0
        %v1101 = vadd.f32 %v1060, %v1100
        %v1102 = vpop.f32.mrf.mxu0
        %1103 = vdwg.mxu0
        %v1104 = vmin.f32 %v1098, 20.0
        %v1105 = vmin.f32 %v1101, 20.0
        %v1106 = vmul.f32 %v1104, 1.442695
        %v1107 = vpow.pop %v1106
        %v1108 = vmul.f32 %v1105, 1.442695
        %v1109 = vpow.pop %v1108
        %v1110 = vadd.f32 %v1107, 2.0
        %v1111 = vadd.f32 %v1109, 2.0
        %v1112 = vmul.f32 %v1107, %v1110
        %v1113 = vmul.f32 %v1109, %v1111
        %v1114 = vadd.f32 %v1112, 2.0
        %v1115 = vadd.f32 %v1113, 2.0
        %v1116 = vrcp.pop %v1114
        %v1117 = vrcp.pop %v1115
        %v1118 = vmul.f32 %v1112, %v1116
        %v1119 = vmul.f32 %v1113, %v1117
        %v1120 = vmul.f32 %v1098, %v1118
        %v1121 = vmul.f32 %v1101, %v1119
        %v1122 = vpack.c.bf16 %v1121, %v1120
        %v1124 = vlaneseq
        %v1125 = vshrl.u32 %v1124, 7
        %v1126 = vsub.s32 0, %v1125
        %v1127 = vrot.slane %v434, %v1126
        %v1145 = vunpack.c.l.b16 %v417
        %v1146 = vunpack.c.l.b16 %v418
        %v1147 = vunpack.c.l.b16 %v419
        %v1148 = vunpack.c.l.b16 %v420
        %v1149 = vunpack.c.l.b16 %v421
        %v1150 = vunpack.c.l.b16 %v422
        %v1151 = vunpack.c.l.b16 %v423
        %v1152 = vunpack.c.l.b16 %v424
        %v1153 = vunpack.c.l.b16 %v425
        %v1154 = vunpack.c.l.b16 %v426
        %v1155 = vunpack.c.l.b16 %v427
        %v1156 = vunpack.c.l.b16 %v428
        %v1157 = vunpack.c.l.b16 %v429
        %v1158 = vunpack.c.l.b16 %v430
        %v1159 = vunpack.c.l.b16 %v431
        %v1160 = vunpack.c.l.b16 %v432
        %v1161 = vpack.c.b16 %v1146, %v1145
        %v1162 = vpack.c.b16 %v1148, %v1147
        %v1163 = vpack.c.b16 %v1150, %v1149
        %v1164 = vpack.c.b16 %v1152, %v1151
        %v1165 = vpack.c.b16 %v1154, %v1153
        %v1166 = vpack.c.b16 %v1156, %v1155
        %v1167 = vpack.c.b16 %v1158, %v1157
        %v1168 = vpack.c.b16 %v1160, %v1159
        %1177 = vmatprep.subr.bf16.mxu0 0
        %1178 = vmatpush1.bf16.msra.mxu0 %v1168
        %1179 = vmatprep.subr.bf16.mxu0 0
        %1180 = vmatpush1.bf16.msra.mxu0 %v1167
        %1181 = vmatprep.subr.bf16.mxu0 0
        %1182 = vmatpush1.bf16.msra.mxu0 %v1166
        %1183 = vmatprep.subr.bf16.mxu0 0
        %1184 = vmatpush1.bf16.msra.mxu0 %v1165
        %1185 = vmatprep.subr.bf16.mxu0 0
        %1186 = vmatpush1.bf16.msra.mxu0 %v1164
        %1187 = vmatprep.subr.bf16.mxu0 0
        %1188 = vmatpush1.bf16.msra.mxu0 %v1163
        %1189 = vmatprep.subr.bf16.mxu0 0
        %1190 = vmatpush1.bf16.msra.mxu0 %v1162
        %1191 = vmatprep.subr.bf16.mxu0 0
        %1192 = vmatpush1.bf16.msra.mxu0 %v1161
        %1193 = vmatprep.subr.bf16.mxu0 0
        %1194 = vmatpush2.bf16.msra.mxu0 0
        %1195 = vmatprep.subr.bf16.mxu0 0
        %1196 = vmatpush2.bf16.msra.mxu0 0
        %1197 = vmatprep.subr.bf16.mxu0 0
        %1198 = vmatpush2.bf16.msra.mxu0 0
        %1199 = vmatprep.subr.bf16.mxu0 0
        %1200 = vmatpush2.bf16.msra.mxu0 0
        %1201 = vmatprep.subr.bf16.mxu0 0
        %1202 = vmatpush2.bf16.msra.mxu0 0
        %1203 = vmatprep.subr.bf16.mxu0 0
        %1204 = vmatpush2.bf16.msra.mxu0 0
        %1205 = vmatprep.subr.bf16.mxu0 0
        %1206 = vmatpush2.bf16.msra.mxu0 0
        %1207 = vmatprep.subr.bf16.mxu0 0
        %1208 = vmatpush2.bf16.msra.mxu0 0
        %1209 = vmatprep.mubr.bf16.mxu0 0
        %1210 = vmatmul.mubr.bf16.gmra.mxu0 %v1122
        %v1211 = vpop.f32.mrf.mxu0
        %v1212 = vadd.f32 %v1127, %v1211
        %v1213 = vpop.f32.mrf.mxu0
        %v1214 = vpop.f32.mrf.mxu0
        %v1215 = vadd.f32 %v1127, %v1214
        %v1216 = vpop.f32.mrf.mxu0
        %1217 = vdwg.mxu0
        %v1218 = vadd.f32 %v1212, %v447
        %v1219 = vadd.f32 %v1215, %v448
        %1220 = vst [vmem:[%s271] sm:$0xff] %v1218
        %1221 = vst [vmem:[%s271 + $0x8] sm:$0xff] %v1219
        %s1222 = sand.u32 %s141, 1
        %s1223 = scalar_lea.sflag [#allocation4], %s1222
        %s1224 = sand.u32 %s141, 1
        %s1225 = smul.addr %s1224, 16
        %s1226 = scalar_lea.vmem [#allocation8], %s1225
        // Predicated region
        $region53: #{tpu_custom_call.1} parent=39 // pred_check
          %p1227 = pneg %p151
        $region54: #{tpu_custom_call.1} parent=39 // pred_check_branch
          %1229 = sbr.rel (%p1227) target = $region56
        $region55: #{tpu_custom_call.1} parent=39 // pred_region
          %s1231 = ssub.s32 256, 256
          %1232 = vsyncadd %s1223, %s1231
          %s1233 = smul.addr %s23, 2
          %s1234 = smul.addr %s1233, 128
          %s1235 = scalar_lea.hbm %s5, %s1234
          %s1236 = sshll.u32 %s1226, 4
          %s1237 = int_to_ptr.vmem [resolvable:$true] %s1236
          %1242 = dma.vmem_to_hbm [thread:$0]  %s1237, 256, %s1235, %s1223, 128, 128, 8
        $region56: #{tpu_custom_call.1} parent=39 // pred_fallthru
          _
      $region40: #{tpu_custom_call.1} parent=5 // pred_fallthru
        _
      %p1243 = scmp.le.s32.totalorder 2, %s18
      // Predicated region
      $region57: #{tpu_custom_call.1} parent=5 // pred_check
        %p1244 = pneg %p1243
      $region58: #{tpu_custom_call.1} parent=5 // pred_check_branch
        %1246 = sbr.rel (%p1244) target = $region60
      $region59: #{tpu_custom_call.1} parent=5 // pred_region
        %s1247 = ssub.s32 %s18, 2
        // Predicated region
        $region61: #{tpu_custom_call.1} parent=59 // pred_check
          %p1248 = pneg %p157
        $region62: #{tpu_custom_call.1} parent=59 // pred_check_branch
          %1250 = sbr.rel (%p1248) target = $region64
        $region63: #{tpu_custom_call.1} parent=59 // pred_region
          %s1251 = sand.u32 %s142, 1
          %s1252 = scalar_lea.sflag [#allocation4], %s1251
          %s1253 = sand.u32 %s142, 1
          %s1254 = smul.addr %s1253, 16
          %s1255 = scalar_lea.vmem [#allocation8], %s1254
          %1256 = dma.done %s1252, 256
        $region64: #{tpu_custom_call.1} parent=59 // pred_fallthru
          _
      $region60: #{tpu_custom_call.1} parent=5 // pred_fallthru
        _
    $region6: #{tpu_custom_call.1} parent=1 // loop_footer
      %s22 = sadd.s32 1, %s18
    $region7: #{tpu_custom_call.1} parent=1 // loop_footer_branch
      %17 = sbr.rel target = $region3
    $region8: #{tpu_custom_call.1} parent=1 // loop_exit
      _
    %1257 = vsyncpa [#allocation3], 1
    %s1258 = scalar_lea.sflag [#allocation3], 1
    %1259 = vsyncpa %s1258, 1
    %1260 = vsyncpa [#allocation6], 1
    %1261 = vsyncpa [#allocation4], 1
    %s1262 = scalar_lea.sflag [#allocation4], 1
    %1263 = vsyncpa %s1262, 1

</llo_original>
